<compile_context>
chip_gen: v5e
topology: v5e:2x2
jax: 0.10.0
libtpu: 0.0.40
codegen_flags: <defaults>
</compile_context>

<pallas_src>
import math
import numpy as np
import jax
import jax.numpy as jnp
from jax.experimental import pallas as pl

# small shapes consistent with the module (B bumped to 8 to fill all sublanes)
B, T, F, H, M, D = 8, 8, 8, 32, 16, 8   # batch, seq, feature, rnn_hidden, mlp_hidden, output
LOG2PI = math.log(2.0 * math.pi)
G = 4 * H        # 128 gate columns (clean vreg lane boundary)
W1C = 3 * M      # 48 fused head layer-1 columns
HD = 2 * D + 1   # 17 fused head layer-2 columns


def _decoder_kernel(feat_ref, noise_ref, gt_out_ref, gt_off_ref,
                    wfhc_ref, bfhc_ref, wih_ref, wh_ref, blstm_ref,
                    b1_ref, w2_ref, b2_ref,
                    rnn_out_ref, mean_ref, logvar_ref, samp_ref, off_ref,
                    eloss_ref, oloss_ref):
    # Resident weights (a handful of vregs) loaded once; per-step data (noise /
    # ground truth) is loaded inside the loop to keep live ranges short.
    wih = wih_ref[...]       # (D, 4H)      bf16
    wh = wh_ref[...]         # (H, 4H+3M)   bf16  [whh | w1_mean | w1_lv | w1_off]
    w2 = w2_ref[...]         # (3M, 2D+1)   bf16  block-diagonal layer-2
    blstm = blstm_ref[...]   # (1, 4H)      f32
    b1 = b1_ref[...]         # (1, 3M)      f32
    b2 = b2_ref[...]         # (1, 2D+1)    f32

    # feature2hidden + reshape_hidden, fused into one matmul: feat @ [wfh | wfc]
    feat_bf = feat_ref[...].astype(jnp.bfloat16)
    hc = jnp.dot(feat_bf, wfhc_ref[...],
                 preferred_element_type=jnp.float32) + bfhc_ref[...]
    h = hc[:, 0:H]
    c = hc[:, H:2 * H]

    # h is consumed by BOTH the next step's recurrent gates (whh) and the
    # current step's fused emission-head layer 1 (w1): one fused matmul, the
    # 176-col result sliced at lane 128 (clean vreg boundary).
    hw = jnp.dot(h.astype(jnp.bfloat16), wh, preferred_element_type=jnp.float32)
    h_gates = hw[:, 0:G]

    eloss_acc = jnp.zeros((B, D), jnp.float32)
    oloss_acc = jnp.zeros((B, 1), jnp.float32)

    # T is tiny -> static unroll (full LLO scheduler visibility, zero grid overhead)
    for t in range(T):
        # torch.nn.LSTMCell gate order: i, f, g, o
        if t == 0:
            gates = h_gates + blstm            # x == 0 at t=0 -> x @ wih == 0, skip the dot
        else:
            gates = (jnp.dot(x.astype(jnp.bfloat16), wih,          # noqa: F821
                             preferred_element_type=jnp.float32)
                     + h_gates + blstm)

        # two full 128-lane nonlinearity passes instead of four quarter-width ones
        sig = jax.nn.sigmoid(gates)
        tnh = jnp.tanh(gates)
        i_g = sig[:, 0 * H:1 * H]
        f_g = sig[:, 1 * H:2 * H]
        g_g = tnh[:, 2 * H:3 * H]
        o_g = sig[:, 3 * H:4 * H]
        c = f_g * c + i_g * g_g
        h = o_g * jnp.tanh(c)

        # fused h matmul: next-step gate contribution + fused head layer-1
        hw = jnp.dot(h.astype(jnp.bfloat16), wh, preferred_element_type=jnp.float32)
        h_gates = hw[:, 0:G]
        hid = jnp.tanh(hw[:, G:G + W1C] + b1)                      # (B, 3M)

        # fused block-diagonal head layer-2: [mean | logvar | offset_logit]
        head = jnp.dot(hid.astype(jnp.bfloat16), w2,
                       preferred_element_type=jnp.float32) + b2    # (B, 2D+1)
        mean = head[:, 0:D]
        logvar = head[:, D:2 * D]
        off = head[:, 2 * D:2 * D + 1]

        # reparameterized sample; becomes next step's input (self feedback)
        samp = mean + jnp.exp(0.5 * logvar) * noise_ref[t]
        x = samp

        # emission loss = -log_pdf_isotropic_gaussian(gt, mean, logvar):
        # accumulate element-wise, reduce once after the loop
        diff = gt_out_ref[pl.ds(t * B, B), :] - mean
        eloss_acc = eloss_acc + (logvar + diff * jnp.exp(-logvar) * diff)

        # offset loss = BCEWithLogitsLoss(reduction='sum'), stable form,
        # element-wise accumulation
        z = off
        y = gt_off_ref[pl.ds(t * B, B), :]
        oloss_acc = oloss_acc + (jnp.maximum(z, 0.0) - z * y
                                 + jnp.log1p(jnp.exp(-jnp.abs(z))))

        # already-flattened (T*B, C) output slabs: no post-kernel reshapes
        rnn_out_ref[pl.ds(t * B, B), :] = h
        mean_ref[pl.ds(t * B, B), :] = mean
        logvar_ref[pl.ds(t * B, B), :] = logvar
        samp_ref[pl.ds(t * B, B), :] = samp
        off_ref[pl.ds(t * B, B), :] = off

    # single cross-lane reduction per loss, constant term hoisted
    eloss_ref[...] = (jnp.zeros((1, 1), jnp.float32)
                      + 0.5 * (T * B * D * LOG2PI + jnp.sum(eloss_acc)))
    oloss_ref[...] = jnp.zeros((1, 1), jnp.float32) + jnp.sum(oloss_acc)


def pack_decoder_params(params):
    """One-time weight packing / fusion, hoisted out of the per-call jit path."""
    # feature2hidden weight is (2H, F); .view(-1, H, 2) => row 2j -> h, 2j+1 -> c
    wf, bf = params["f2h_w"], params["f2h_b"]
    wfh = jnp.transpose(wf[0::2, :])                                  # (F, H)
    wfc = jnp.transpose(wf[1::2, :])                                  # (F, H)
    wfhc = jnp.concatenate([wfh, wfc], axis=1).astype(jnp.bfloat16)   # (F, 2H)
    bfhc = jnp.concatenate([bf[0::2], bf[1::2]])[None, :]             # (1, 2H) f32

    wih = jnp.transpose(params["lstm_w_ih"]).astype(jnp.bfloat16)     # (D, 4H)
    w1 = jnp.concatenate([params["mean_w1"].T, params["lv_w1"].T,
                          params["off_w1"].T], axis=1)                # (H, 3M)
    wh = jnp.concatenate([jnp.transpose(params["lstm_w_hh"]), w1],
                         axis=1).astype(jnp.bfloat16)                 # (H, 4H+3M)
    blstm = (params["lstm_b_ih"] + params["lstm_b_hh"])[None, :]      # (1, 4H) f32

    b1 = jnp.concatenate([params["mean_b1"], params["lv_b1"],
                          params["off_b1"]])[None, :]                 # (1, 3M) f32
    w2 = jnp.zeros((3 * M, 2 * D + 1), jnp.float32)                   # block-diagonal
    w2 = w2.at[0:M, 0:D].set(params["mean_w2"].T)
    w2 = w2.at[M:2 * M, D:2 * D].set(params["lv_w2"].T)
    w2 = w2.at[2 * M:3 * M, 2 * D:2 * D + 1].set(params["off_w2"].T)
    w2 = w2.astype(jnp.bfloat16)                                      # (3M, 2D+1)
    b2 = jnp.concatenate([params["mean_b2"], params["lv_b2"],
                          params["off_b2"]])[None, :]                 # (1, 2D+1) f32
    return (wfhc, bfhc, wih, wh, blstm, b1, w2, b2)


@jax.jit
def rnn_variational_decoder_forward(packed, features, noise, gt_out, gt_off):
    wfhc, bfhc, wih, wh, blstm, b1, w2, b2 = packed

    out_shape = [
        jax.ShapeDtypeStruct((T * B, H), jnp.float32),   # flatten rnn_out
        jax.ShapeDtypeStruct((T * B, D), jnp.float32),   # flatten mean
        jax.ShapeDtypeStruct((T * B, D), jnp.float32),   # flatten logvar
        jax.ShapeDtypeStruct((T * B, D), jnp.float32),   # flatten samples
        jax.ShapeDtypeStruct((T * B, 1), jnp.float32),   # flatten offset logits
        jax.ShapeDtypeStruct((1, 1), jnp.float32),       # emission loss
        jax.ShapeDtypeStruct((1, 1), jnp.float32),       # offset loss
    ]

    # No grid: everything (a few KB) is VMEM-resident, single kernel invocation.
    # TODO(synk): on v7x, decoding several independent sequences would add a
    #   leading "parallel" grid axis to use the second TensorCore.
    outs = pl.pallas_call(
        _decoder_kernel,
        out_shape=out_shape,
    )(features, noise, gt_out, gt_off[:, None],
      wfhc, bfhc, wih, wh, blstm, b1, w2, b2)

    rnn_out, mean, logvar, samples, off_logits, eloss, oloss = outs
    return (eloss[0, 0], oloss[0, 0], samples,
            (mean, logvar), off_logits[:, 0], rnn_out)


def reference_forward(params, features, noise, gt_out, gt_off):
    """Pure-JAX f32 replica of the PyTorch forward (equal-length sequences)."""
    hidden_full = features @ params["f2h_w"].T + params["f2h_b"]
    hv = hidden_full.reshape(B, H, 2)
    h, c = hv[..., 0], hv[..., 1]
    x = jnp.zeros((B, D), jnp.float32)
    wih_t = params["lstm_w_ih"].T
    whh_t = params["lstm_w_hh"].T
    b = params["lstm_b_ih"] + params["lstm_b_hh"]

    def mlp(xin, w1, b1, w2, b2):
        return jnp.tanh(xin @ w1.T + b1) @ w2.T + b2

    rnn_outs, means, logvars, samples, offs = [], [], [], [], []
    for t in range(T):
        gates = x @ wih_t + h @ whh_t + b
        i_g = jax.nn.sigmoid(gates[:, :H])
        f_g = jax.nn.sigmoid(gates[:, H:2 * H])
        g_g = jnp.tanh(gates[:, 2 * H:3 * H])
        o_g = jax.nn.sigmoid(gates[:, 3 * H:])
        c = f_g * c + i_g * g_g
        h = o_g * jnp.tanh(c)
        mean = mlp(h, params["mean_w1"], params["mean_b1"], params["mean_w2"], params["mean_b2"])
        logvar = mlp(h, params["lv_w1"], params["lv_b1"], params["lv_w2"], params["lv_b2"])
        x = mean + jnp.exp(0.5 * logvar) * noise[t]
        off = mlp(h, params["off_w1"], params["off_b1"], params["off_w2"], params["off_b2"])
        rnn_outs.append(h); means.append(mean); logvars.append(logvar)
        samples.append(x); offs.append(off[:, 0])
    mean_f = jnp.concatenate(means); lv_f = jnp.concatenate(logvars)
    out_f = jnp.concatenate(samples); off_f = jnp.concatenate(offs)
    diff = gt_out - mean_f
    eloss = 0.5 * jnp.sum(LOG2PI + lv_f + diff * jnp.exp(-lv_f) * diff)
    z, y = off_f, gt_off
    oloss = jnp.sum(jnp.maximum(z, 0.0) - z * y + jnp.log1p(jnp.exp(-jnp.abs(z))))
    return eloss, oloss, out_f, (mean_f, lv_f), off_f, jnp.concatenate(rnn_outs)


def init_params(key):
    ks = jax.random.split(key, 20)

    def uni(k, shape, fan_in):
        lim = 1.0 / math.sqrt(fan_in)
        return jax.random.uniform(k, shape, jnp.float32, -lim, lim)

    p = {
        # feature2hidden: Linear(F, 2H)   (LSTM => hidden_size_total = 2*H)
        "f2h_w": uni(ks[0], (2 * H, F), F), "f2h_b": uni(ks[1], (2 * H,), F),
        # LSTMCell(D, H)
        "lstm_w_ih": uni(ks[2], (4 * H, D), H), "lstm_w_hh": uni(ks[3], (4 * H, H), H),
        "lstm_b_ih": uni(ks[4], (4 * H,), H), "lstm_b_hh": uni(ks[5], (4 * H,), H),
        # emission sampler MLPs (mean, logvar): H -> M -> D
        "mean_w1": uni(ks[6], (M, H), H), "mean_b1": uni(ks[7], (M,), H),
        "mean_w2": uni(ks[8], (D, M), M), "mean_b2": uni(ks[9], (D,), M),
        "lv_w1": uni(ks[10], (M, H), H), "lv_b1": uni(ks[11], (M,), H),
        "lv_w2": uni(ks[12], (D, M), M), "lv_b2": uni(ks[13], (D,), M),
        # offset predictor MLP: H -> M -> 1
        "off_w1": uni(ks[14], (M, H), H), "off_b1": uni(ks[15], (M,), H),
        "off_w2": uni(ks[16], (1, M), M), "off_b2": uni(ks[17], (1,), M),
    }
    return p


if __name__ == "__main__":
    key = jax.random.PRNGKey(0)
    kp, kf, kn, kg, ko = jax.random.split(key, 5)
    params = init_params(kp)

    # one-time weight packing, outside the per-call jitted forward
    packed = pack_decoder_params(params)
    packed = jax.block_until_ready(packed)

    features = jax.random.normal(kf, (B, F), jnp.float32)
    # randn_like() replaced by pre-drawn noise, one draw per emitted frame
    noise = jax.random.normal(kn, (T, B, D), jnp.float32)
    ground_truth_out = jax.random.normal(kg, (T * B, D), jnp.float32)
    ground_truth_offset = jax.random.bernoulli(ko, 0.3, (T * B,)).astype(jnp.float32)

    outs = rnn_variational_decoder_forward(packed, features, noise,
                                           ground_truth_out, ground_truth_offset)
    outs = jax.block_until_ready(outs)

    ref = reference_forward(params, features, noise,
                            ground_truth_out, ground_truth_offset)

    def flat(o):
        return [o[0], o[1], o[2], o[3][0], o[3][1], o[4], o[5]]

    ok = True
    for a, b_ in zip(flat(outs), flat(ref)):
        a = np.asarray(a); b_ = np.asarray(b_)
        if not np.all(np.isfinite(a)) or not np.allclose(a, b_, rtol=5e-2, atol=5e-2):
            ok = False
    if not ok:
        raise SystemExit("mismatch between Pallas kernel and reference")
    print("KERNEL_OK")
</pallas_src>

<mosaic_0001>
module attributes {stable_mosaic.version = 11 : i64} {
  func.func @_decoder_kernel(%arg0: memref<8x8xf32, #tpu.memory_space<vmem>>, %arg1: memref<8x8x8xf32, #tpu.memory_space<vmem>>, %arg2: memref<64x8xf32, #tpu.memory_space<vmem>>, %arg3: memref<64x1xf32, #tpu.memory_space<vmem>>, %arg4: memref<8x64xbf16, #tpu.memory_space<vmem>>, %arg5: memref<1x64xf32, #tpu.memory_space<vmem>>, %arg6: memref<8x128xbf16, #tpu.memory_space<vmem>>, %arg7: memref<32x176xbf16, #tpu.memory_space<vmem>>, %arg8: memref<1x128xf32, #tpu.memory_space<vmem>>, %arg9: memref<1x48xf32, #tpu.memory_space<vmem>>, %arg10: memref<48x17xbf16, #tpu.memory_space<vmem>>, %arg11: memref<1x17xf32, #tpu.memory_space<vmem>>, %arg12: memref<64x32xf32, #tpu.memory_space<vmem>>, %arg13: memref<64x8xf32, #tpu.memory_space<vmem>>, %arg14: memref<64x8xf32, #tpu.memory_space<vmem>>, %arg15: memref<64x8xf32, #tpu.memory_space<vmem>>, %arg16: memref<64x1xf32, #tpu.memory_space<vmem>>, %arg17: memref<1x1xf32, #tpu.memory_space<vmem>>, %arg18: memref<1x1xf32, #tpu.memory_space<vmem>>) attributes {dimension_semantics = [], scalar_prefetch = 0 : i64, scratch_operands = 0 : i64, tpu.core_type = #tpu.core_type<tc>} {
    %c0 = arith.constant 0 : index
    %c0_0 = arith.constant 0 : index
    %0 = vector.load %arg6[%c0, %c0_0] : memref<8x128xbf16, #tpu.memory_space<vmem>>, vector<8x128xbf16>
    %c0_1 = arith.constant 0 : index
    %c0_2 = arith.constant 0 : index
    %1 = vector.load %arg7[%c0_1, %c0_2] : memref<32x176xbf16, #tpu.memory_space<vmem>>, vector<32x176xbf16>
    %c0_3 = arith.constant 0 : index
    %c0_4 = arith.constant 0 : index
    %2 = vector.load %arg10[%c0_3, %c0_4] : memref<48x17xbf16, #tpu.memory_space<vmem>>, vector<48x17xbf16>
    %c0_5 = arith.constant 0 : index
    %c0_6 = arith.constant 0 : index
    %3 = vector.load %arg8[%c0_5, %c0_6] : memref<1x128xf32, #tpu.memory_space<vmem>>, vector<1x128xf32>
    %c0_7 = arith.constant 0 : index
    %c0_8 = arith.constant 0 : index
    %4 = vector.load %arg9[%c0_7, %c0_8] : memref<1x48xf32, #tpu.memory_space<vmem>>, vector<1x48xf32>
    %c0_9 = arith.constant 0 : index
    %c0_10 = arith.constant 0 : index
    %5 = vector.load %arg11[%c0_9, %c0_10] : memref<1x17xf32, #tpu.memory_space<vmem>>, vector<1x17xf32>
    %c0_11 = arith.constant 0 : index
    %c0_12 = arith.constant 0 : index
    %6 = vector.load %arg0[%c0_11, %c0_12] : memref<8x8xf32, #tpu.memory_space<vmem>>, vector<8x8xf32>
    %7 = arith.truncf %6 : vector<8x8xf32> to vector<8x8xbf16>
    %c0_13 = arith.constant 0 : index
    %c0_14 = arith.constant 0 : index
    %8 = vector.load %arg4[%c0_13, %c0_14] : memref<8x64xbf16, #tpu.memory_space<vmem>>, vector<8x64xbf16>
    %cst = arith.constant dense<0.000000e+00> : vector<8x64xf32>
    %9 = tpu.matmul %7, %8, %cst {dimension_numbers = #tpu.dot_dimension_numbers<[1], [0], [0], [1], [0, 0, 1, 1], [], []>} : vector<8x8xbf16>, vector<8x64xbf16>, vector<8x64xf32> -> vector<8x64xf32>
    %c0_15 = arith.constant 0 : index
    %c0_16 = arith.constant 0 : index
    %10 = vector.load %arg5[%c0_15, %c0_16] : memref<1x64xf32, #tpu.memory_space<vmem>>, vector<1x64xf32>
    %11 = vector.broadcast %10 : vector<1x64xf32> to vector<8x64xf32>
    %12 = arith.addf %9, %11 : vector<8x64xf32>
    %13 = vector.extract_strided_slice %12 {offsets = [0, 0], sizes = [8, 32], strides = [1, 1]} : vector<8x64xf32> to vector<8x32xf32>
    %14 = vector.extract_strided_slice %12 {offsets = [0, 32], sizes = [8, 32], strides = [1, 1]} : vector<8x64xf32> to vector<8x32xf32>
    %15 = arith.truncf %13 : vector<8x32xf32> to vector<8x32xbf16>
    %cst_17 = arith.constant dense<0.000000e+00> : vector<8x176xf32>
    %16 = tpu.matmul %15, %1, %cst_17 {dimension_numbers = #tpu.dot_dimension_numbers<[1], [0], [0], [1], [0, 0, 1, 1], [], []>} : vector<8x32xbf16>, vector<32x176xbf16>, vector<8x176xf32> -> vector<8x176xf32>
    %17 = vector.extract_strided_slice %16 {offsets = [0, 0], sizes = [8, 128], strides = [1, 1]} : vector<8x176xf32> to vector<8x128xf32>
    %cst_18 = arith.constant 0.000000e+00 : f32
    %18 = vector.broadcast %cst_18 : f32 to vector<8x8xf32>
    %cst_19 = arith.constant 0.000000e+00 : f32
    %19 = vector.broadcast %cst_19 : f32 to vector<8x1xf32>
    %20 = vector.broadcast %3 : vector<1x128xf32> to vector<8x128xf32>
    %21 = arith.addf %17, %20 : vector<8x128xf32>
    %22 = arith.negf %21 : vector<8x128xf32>
    %23 = math.exp %22 : vector<8x128xf32>
    %cst_20 = arith.constant 1.000000e+00 : f32
    %24 = vector.broadcast %cst_20 : f32 to vector<8x128xf32>
    %25 = arith.addf %24, %23 : vector<8x128xf32>
    %26 = arith.divf %24, %25 : vector<8x128xf32>
    %27 = math.tanh %21 : vector<8x128xf32>
    %28 = vector.extract_strided_slice %26 {offsets = [0, 0], sizes = [8, 32], strides = [1, 1]} : vector<8x128xf32> to vector<8x32xf32>
    %29 = vector.extract_strided_slice %26 {offsets = [0, 32], sizes = [8, 32], strides = [1, 1]} : vector<8x128xf32> to vector<8x32xf32>
    %30 = vector.extract_strided_slice %27 {offsets = [0, 64], sizes = [8, 32], strides = [1, 1]} : vector<8x128xf32> to vector<8x32xf32>
    %31 = vector.extract_strided_slice %26 {offsets = [0, 96], sizes = [8, 32], strides = [1, 1]} : vector<8x128xf32> to vector<8x32xf32>
    %32 = arith.mulf %29, %14 : vector<8x32xf32>
    %33 = arith.mulf %28, %30 : vector<8x32xf32>
    %34 = arith.addf %32, %33 : vector<8x32xf32>
    %35 = math.tanh %34 : vector<8x32xf32>
    %36 = arith.mulf %31, %35 : vector<8x32xf32>
    %37 = arith.truncf %36 : vector<8x32xf32> to vector<8x32xbf16>
    %cst_21 = arith.constant dense<0.000000e+00> : vector<8x176xf32>
    %38 = tpu.matmul %37, %1, %cst_21 {dimension_numbers = #tpu.dot_dimension_numbers<[1], [0], [0], [1], [0, 0, 1, 1], [], []>} : vector<8x32xbf16>, vector<32x176xbf16>, vector<8x176xf32> -> vector<8x176xf32>
    %39 = vector.extract_strided_slice %38 {offsets = [0, 0], sizes = [8, 128], strides = [1, 1]} : vector<8x176xf32> to vector<8x128xf32>
    %40 = vector.extract_strided_slice %38 {offsets = [0, 128], sizes = [8, 48], strides = [1, 1]} : vector<8x176xf32> to vector<8x48xf32>
    %41 = vector.broadcast %4 : vector<1x48xf32> to vector<8x48xf32>
    %42 = arith.addf %40, %41 : vector<8x48xf32>
    %43 = math.tanh %42 : vector<8x48xf32>
    %44 = arith.truncf %43 : vector<8x48xf32> to vector<8x48xbf16>
    %cst_22 = arith.constant dense<0.000000e+00> : vector<8x17xf32>
    %45 = tpu.matmul %44, %2, %cst_22 {dimension_numbers = #tpu.dot_dimension_numbers<[1], [0], [0], [1], [0, 0, 1, 1], [], []>} : vector<8x48xbf16>, vector<48x17xbf16>, vector<8x17xf32> -> vector<8x17xf32>
    %46 = vector.broadcast %5 : vector<1x17xf32> to vector<8x17xf32>
    %47 = arith.addf %45, %46 : vector<8x17xf32>
    %48 = vector.extract_strided_slice %47 {offsets = [0, 0], sizes = [8, 8], strides = [1, 1]} : vector<8x17xf32> to vector<8x8xf32>
    %49 = vector.extract_strided_slice %47 {offsets = [0, 8], sizes = [8, 8], strides = [1, 1]} : vector<8x17xf32> to vector<8x8xf32>
    %50 = vector.extract_strided_slice %47 {offsets = [0, 16], sizes = [8, 1], strides = [1, 1]} : vector<8x17xf32> to vector<8x1xf32>
    %cst_23 = arith.constant 5.000000e-01 : f32
    %51 = vector.broadcast %cst_23 : f32 to vector<8x8xf32>
    %52 = arith.mulf %51, %49 : vector<8x8xf32>
    %53 = math.exp %52 : vector<8x8xf32>
    %c0_24 = arith.constant 0 : index
    %c0_25 = arith.constant 0 : index
    %c0_26 = arith.constant 0 : index
    %54 = vector.load %arg1[%c0_24, %c0_25, %c0_26] : memref<8x8x8xf32, #tpu.memory_space<vmem>>, vector<1x8x8xf32>
    %55 = vector.shape_cast %54 : vector<1x8x8xf32> to vector<8x8xf32>
    %56 = arith.mulf %53, %55 : vector<8x8xf32>
    %57 = arith.addf %48, %56 : vector<8x8xf32>
    %c0_27 = arith.constant 0 : index
    %c0_28 = arith.constant 0 : index
    %58 = vector.load %arg2[%c0_27, %c0_28] : memref<64x8xf32, #tpu.memory_space<vmem>>, vector<8x8xf32>
    %59 = arith.subf %58, %48 : vector<8x8xf32>
    %cst_29 = arith.constant 0.000000e+00 : f32
    %60 = vector.broadcast %cst_29 : f32 to vector<8x8xf32>
    %61 = arith.subf %60, %49 : vector<8x8xf32>
    %62 = math.exp %61 : vector<8x8xf32>
    %63 = arith.mulf %59, %62 : vector<8x8xf32>
    %64 = arith.mulf %63, %59 : vector<8x8xf32>
    %65 = arith.addf %49, %64 : vector<8x8xf32>
    %66 = arith.addf %18, %65 : vector<8x8xf32>
    %c0_30 = arith.constant 0 : index
    %c0_31 = arith.constant 0 : index
    %67 = vector.load %arg3[%c0_30, %c0_31] : memref<64x1xf32, #tpu.memory_space<vmem>>, vector<8x1xf32>
    %cst_32 = arith.constant 0.000000e+00 : f32
    %68 = vector.broadcast %cst_32 : f32 to vector<8x1xf32>
    %69 = arith.maximumf %50, %68 : vector<8x1xf32>
    %70 = arith.mulf %50, %67 : vector<8x1xf32>
    %71 = arith.subf %69, %70 : vector<8x1xf32>
    %72 = math.absf %50 : vector<8x1xf32>
    %cst_33 = arith.constant 0.000000e+00 : f32
    %73 = vector.broadcast %cst_33 : f32 to vector<8x1xf32>
    %74 = arith.subf %73, %72 : vector<8x1xf32>
    %75 = math.exp %74 : vector<8x1xf32>
    %76 = math.log1p %75 : vector<8x1xf32>
    %77 = arith.addf %71, %76 : vector<8x1xf32>
    %78 = arith.addf %19, %77 : vector<8x1xf32>
    %c0_34 = arith.constant 0 : index
    %c0_35 = arith.constant 0 : index
    %79 = vector.load %arg12[%c0_34, %c0_35] : memref<64x32xf32, #tpu.memory_space<vmem>>, vector<8x32xf32>
    tpu.vector_store %arg12[%c0_34, %c0_35], %36 {strides = array<i32>} : memref<64x32xf32, #tpu.memory_space<vmem>>, vector<8x32xf32>,
    %c0_36 = arith.constant 0 : index
    %c0_37 = arith.constant 0 : index
    %80 = vector.load %arg13[%c0_36, %c0_37] : memref<64x8xf32, #tpu.memory_space<vmem>>, vector<8x8xf32>
    tpu.vector_store %arg13[%c0_36, %c0_37], %48 {strides = array<i32>} : memref<64x8xf32, #tpu.memory_space<vmem>>, vector<8x8xf32>,
    %c0_38 = arith.constant 0 : index
    %c0_39 = arith.constant 0 : index
    %81 = vector.load %arg14[%c0_38, %c0_39] : memref<64x8xf32, #tpu.memory_space<vmem>>, vector<8x8xf32>
    tpu.vector_store %arg14[%c0_38, %c0_39], %49 {strides = array<i32>} : memref<64x8xf32, #tpu.memory_space<vmem>>, vector<8x8xf32>,
    %c0_40 = arith.constant 0 : index
    %c0_41 = arith.constant 0 : index
    %82 = vector.load %arg15[%c0_40, %c0_41] : memref<64x8xf32, #tpu.memory_space<vmem>>, vector<8x8xf32>
    tpu.vector_store %arg15[%c0_40, %c0_41], %57 {strides = array<i32>} : memref<64x8xf32, #tpu.memory_space<vmem>>, vector<8x8xf32>,
    %c0_42 = arith.constant 0 : index
    %c0_43 = arith.constant 0 : index
    %83 = vector.load %arg16[%c0_42, %c0_43] : memref<64x1xf32, #tpu.memory_space<vmem>>, vector<8x1xf32>
    tpu.vector_store %arg16[%c0_42, %c0_43], %50 {strides = array<i32>} : memref<64x1xf32, #tpu.memory_space<vmem>>, vector<8x1xf32>,
    %84 = arith.truncf %57 : vector<8x8xf32> to vector<8x8xbf16>
    %cst_44 = arith.constant dense<0.000000e+00> : vector<8x128xf32>
    %85 = tpu.matmul %84, %0, %cst_44 {dimension_numbers = #tpu.dot_dimension_numbers<[1], [0], [0], [1], [0, 0, 1, 1], [], []>} : vector<8x8xbf16>, vector<8x128xbf16>, vector<8x128xf32> -> vector<8x128xf32>
    %86 = arith.addf %85, %39 : vector<8x128xf32>
    %87 = vector.broadcast %3 : vector<1x128xf32> to vector<8x128xf32>
    %88 = arith.addf %86, %87 : vector<8x128xf32>
    %89 = arith.negf %88 : vector<8x128xf32>
    %90 = math.exp %89 : vector<8x128xf32>
    %cst_45 = arith.constant 1.000000e+00 : f32
    %91 = vector.broadcast %cst_45 : f32 to vector<8x128xf32>
    %92 = arith.addf %91, %90 : vector<8x128xf32>
    %93 = arith.divf %91, %92 : vector<8x128xf32>
    %94 = math.tanh %88 : vector<8x128xf32>
    %95 = vector.extract_strided_slice %93 {offsets = [0, 0], sizes = [8, 32], strides = [1, 1]} : vector<8x128xf32> to vector<8x32xf32>
    %96 = vector.extract_strided_slice %93 {offsets = [0, 32], sizes = [8, 32], strides = [1, 1]} : vector<8x128xf32> to vector<8x32xf32>
    %97 = vector.extract_strided_slice %94 {offsets = [0, 64], sizes = [8, 32], strides = [1, 1]} : vector<8x128xf32> to vector<8x32xf32>
    %98 = vector.extract_strided_slice %93 {offsets = [0, 96], sizes = [8, 32], strides = [1, 1]} : vector<8x128xf32> to vector<8x32xf32>
    %99 = arith.mulf %96, %34 : vector<8x32xf32>
    %100 = arith.mulf %95, %97 : vector<8x32xf32>
    %101 = arith.addf %99, %100 : vector<8x32xf32>
    %102 = math.tanh %101 : vector<8x32xf32>
    %103 = arith.mulf %98, %102 : vector<8x32xf32>
    %104 = arith.truncf %103 : vector<8x32xf32> to vector<8x32xbf16>
    %cst_46 = arith.constant dense<0.000000e+00> : vector<8x176xf32>
    %105 = tpu.matmul %104, %1, %cst_46 {dimension_numbers = #tpu.dot_dimension_numbers<[1], [0], [0], [1], [0, 0, 1, 1], [], []>} : vector<8x32xbf16>, vector<32x176xbf16>, vector<8x176xf32> -> vector<8x176xf32>
    %106 = vector.extract_strided_slice %105 {offsets = [0, 0], sizes = [8, 128], strides = [1, 1]} : vector<8x176xf32> to vector<8x128xf32>
    %107 = vector.extract_strided_slice %105 {offsets = [0, 128], sizes = [8, 48], strides = [1, 1]} : vector<8x176xf32> to vector<8x48xf32>
    %108 = vector.broadcast %4 : vector<1x48xf32> to vector<8x48xf32>
    %109 = arith.addf %107, %108 : vector<8x48xf32>
    %110 = math.tanh %109 : vector<8x48xf32>
    %111 = arith.truncf %110 : vector<8x48xf32> to vector<8x48xbf16>
    %cst_47 = arith.constant dense<0.000000e+00> : vector<8x17xf32>
    %112 = tpu.matmul %111, %2, %cst_47 {dimension_numbers = #tpu.dot_dimension_numbers<[1], [0], [0], [1], [0, 0, 1, 1], [], []>} : vector<8x48xbf16>, vector<48x17xbf16>, vector<8x17xf32> -> vector<8x17xf32>
    %113 = vector.broadcast %5 : vector<1x17xf32> to vector<8x17xf32>
    %114 = arith.addf %112, %113 : vector<8x17xf32>
    %115 = vector.extract_strided_slice %114 {offsets = [0, 0], sizes = [8, 8], strides = [1, 1]} : vector<8x17xf32> to vector<8x8xf32>
    %116 = vector.extract_strided_slice %114 {offsets = [0, 8], sizes = [8, 8], strides = [1, 1]} : vector<8x17xf32> to vector<8x8xf32>
    %117 = vector.extract_strided_slice %114 {offsets = [0, 16], sizes = [8, 1], strides = [1, 1]} : vector<8x17xf32> to vector<8x1xf32>
    %cst_48 = arith.constant 5.000000e-01 : f32
    %118 = vector.broadcast %cst_48 : f32 to vector<8x8xf32>
    %119 = arith.mulf %118, %116 : vector<8x8xf32>
    %120 = math.exp %119 : vector<8x8xf32>
    %c1 = arith.constant 1 : index
    %c0_49 = arith.constant 0 : index
    %c0_50 = arith.constant 0 : index
    %121 = vector.load %arg1[%c1, %c0_49, %c0_50] : memref<8x8x8xf32, #tpu.memory_space<vmem>>, vector<1x8x8xf32>
    %122 = vector.shape_cast %121 : vector<1x8x8xf32> to vector<8x8xf32>
    %123 = arith.mulf %120, %122 : vector<8x8xf32>
    %124 = arith.addf %115, %123 : vector<8x8xf32>
    %c8 = arith.constant 8 : index
    %c0_51 = arith.constant 0 : index
    %125 = vector.load %arg2[%c8, %c0_51] : memref<64x8xf32, #tpu.memory_space<vmem>>, vector<8x8xf32>
    %126 = arith.subf %125, %115 : vector<8x8xf32>
    %cst_52 = arith.constant 0.000000e+00 : f32
    %127 = vector.broadcast %cst_52 : f32 to vector<8x8xf32>
    %128 = arith.subf %127, %116 : vector<8x8xf32>
    %129 = math.exp %128 : vector<8x8xf32>
    %130 = arith.mulf %126, %129 : vector<8x8xf32>
    %131 = arith.mulf %130, %126 : vector<8x8xf32>
    %132 = arith.addf %116, %131 : vector<8x8xf32>
    %133 = arith.addf %66, %132 : vector<8x8xf32>
    %c8_53 = arith.constant 8 : index
    %c0_54 = arith.constant 0 : index
    %134 = vector.load %arg3[%c8_53, %c0_54] : memref<64x1xf32, #tpu.memory_space<vmem>>, vector<8x1xf32>
    %cst_55 = arith.constant 0.000000e+00 : f32
    %135 = vector.broadcast %cst_55 : f32 to vector<8x1xf32>
    %136 = arith.maximumf %117, %135 : vector<8x1xf32>
    %137 = arith.mulf %117, %134 : vector<8x1xf32>
    %138 = arith.subf %136, %137 : vector<8x1xf32>
    %139 = math.absf %117 : vector<8x1xf32>
    %cst_56 = arith.constant 0.000000e+00 : f32
    %140 = vector.broadcast %cst_56 : f32 to vector<8x1xf32>
    %141 = arith.subf %140, %139 : vector<8x1xf32>
    %142 = math.exp %141 : vector<8x1xf32>
    %143 = math.log1p %142 : vector<8x1xf32>
    %144 = arith.addf %138, %143 : vector<8x1xf32>
    %145 = arith.addf %78, %144 : vector<8x1xf32>
    %c8_57 = arith.constant 8 : index
    %c0_58 = arith.constant 0 : index
    %146 = vector.load %arg12[%c8_57, %c0_58] : memref<64x32xf32, #tpu.memory_space<vmem>>, vector<8x32xf32>
    tpu.vector_store %arg12[%c8_57, %c0_58], %103 {strides = array<i32>} : memref<64x32xf32, #tpu.memory_space<vmem>>, vector<8x32xf32>,
    %c8_59 = arith.constant 8 : index
    %c0_60 = arith.constant 0 : index
    %147 = vector.load %arg13[%c8_59, %c0_60] : memref<64x8xf32, #tpu.memory_space<vmem>>, vector<8x8xf32>
    tpu.vector_store %arg13[%c8_59, %c0_60], %115 {strides = array<i32>} : memref<64x8xf32, #tpu.memory_space<vmem>>, vector<8x8xf32>,
    %c8_61 = arith.constant 8 : index
    %c0_62 = arith.constant 0 : index
    %148 = vector.load %arg14[%c8_61, %c0_62] : memref<64x8xf32, #tpu.memory_space<vmem>>, vector<8x8xf32>
    tpu.vector_store %arg14[%c8_61, %c0_62], %116 {strides = array<i32>} : memref<64x8xf32, #tpu.memory_space<vmem>>, vector<8x8xf32>,
    %c8_63 = arith.constant 8 : index
    %c0_64 = arith.constant 0 : index
    %149 = vector.load %arg15[%c8_63, %c0_64] : memref<64x8xf32, #tpu.memory_space<vmem>>, vector<8x8xf32>
    tpu.vector_store %arg15[%c8_63, %c0_64], %124 {strides = array<i32>} : memref<64x8xf32, #tpu.memory_space<vmem>>, vector<8x8xf32>,
    %c8_65 = arith.constant 8 : index
    %c0_66 = arith.constant 0 : index
    %150 = vector.load %arg16[%c8_65, %c0_66] : memref<64x1xf32, #tpu.memory_space<vmem>>, vector<8x1xf32>
    tpu.vector_store %arg16[%c8_65, %c0_66], %117 {strides = array<i32>} : memref<64x1xf32, #tpu.memory_space<vmem>>, vector<8x1xf32>,
    %151 = arith.truncf %124 : vector<8x8xf32> to vector<8x8xbf16>
    %cst_67 = arith.constant dense<0.000000e+00> : vector<8x128xf32>
    %152 = tpu.matmul %151, %0, %cst_67 {dimension_numbers = #tpu.dot_dimension_numbers<[1], [0], [0], [1], [0, 0, 1, 1], [], []>} : vector<8x8xbf16>, vector<8x128xbf16>, vector<8x128xf32> -> vector<8x128xf32>
    %153 = arith.addf %152, %106 : vector<8x128xf32>
    %154 = vector.broadcast %3 : vector<1x128xf32> to vector<8x128xf32>
    %155 = arith.addf %153, %154 : vector<8x128xf32>
    %156 = arith.negf %155 : vector<8x128xf32>
    %157 = math.exp %156 : vector<8x128xf32>
    %cst_68 = arith.constant 1.000000e+00 : f32
    %158 = vector.broadcast %cst_68 : f32 to vector<8x128xf32>
    %159 = arith.addf %158, %157 : vector<8x128xf32>
    %160 = arith.divf %158, %159 : vector<8x128xf32>
    %161 = math.tanh %155 : vector<8x128xf32>
    %162 = vector.extract_strided_slice %160 {offsets = [0, 0], sizes = [8, 32], strides = [1, 1]} : vector<8x128xf32> to vector<8x32xf32>
    %163 = vector.extract_strided_slice %160 {offsets = [0, 32], sizes = [8, 32], strides = [1, 1]} : vector<8x128xf32> to vector<8x32xf32>
    %164 = vector.extract_strided_slice %161 {offsets = [0, 64], sizes = [8, 32], strides = [1, 1]} : vector<8x128xf32> to vector<8x32xf32>
    %165 = vector.extract_strided_slice %160 {offsets = [0, 96], sizes = [8, 32], strides = [1, 1]} : vector<8x128xf32> to vector<8x32xf32>
    %166 = arith.mulf %163, %101 : vector<8x32xf32>
    %167 = arith.mulf %162, %164 : vector<8x32xf32>
    %168 = arith.addf %166, %167 : vector<8x32xf32>
    %169 = math.tanh %168 : vector<8x32xf32>
    %170 = arith.mulf %165, %169 : vector<8x32xf32>
    %171 = arith.truncf %170 : vector<8x32xf32> to vector<8x32xbf16>
    %cst_69 = arith.constant dense<0.000000e+00> : vector<8x176xf32>
    %172 = tpu.matmul %171, %1, %cst_69 {dimension_numbers = #tpu.dot_dimension_numbers<[1], [0], [0], [1], [0, 0, 1, 1], [], []>} : vector<8x32xbf16>, vector<32x176xbf16>, vector<8x176xf32> -> vector<8x176xf32>
    %173 = vector.extract_strided_slice %172 {offsets = [0, 0], sizes = [8, 128], strides = [1, 1]} : vector<8x176xf32> to vector<8x128xf32>
    %174 = vector.extract_strided_slice %172 {offsets = [0, 128], sizes = [8, 48], strides = [1, 1]} : vector<8x176xf32> to vector<8x48xf32>
    %175 = vector.broadcast %4 : vector<1x48xf32> to vector<8x48xf32>
    %176 = arith.addf %174, %175 : vector<8x48xf32>
    %177 = math.tanh %176 : vector<8x48xf32>
    %178 = arith.truncf %177 : vector<8x48xf32> to vector<8x48xbf16>
    %cst_70 = arith.constant dense<0.000000e+00> : vector<8x17xf32>
    %179 = tpu.matmul %178, %2, %cst_70 {dimension_numbers = #tpu.dot_dimension_numbers<[1], [0], [0], [1], [0, 0, 1, 1], [], []>} : vector<8x48xbf16>, vector<48x17xbf16>, vector<8x17xf32> -> vector<8x17xf32>
    %180 = vector.broadcast %5 : vector<1x17xf32> to vector<8x17xf32>
    %181 = arith.addf %179, %180 : vector<8x17xf32>
    %182 = vector.extract_strided_slice %181 {offsets = [0, 0], sizes = [8, 8], strides = [1, 1]} : vector<8x17xf32> to vector<8x8xf32>
    %183 = vector.extract_strided_slice %181 {offsets = [0, 8], sizes = [8, 8], strides = [1, 1]} : vector<8x17xf32> to vector<8x8xf32>
    %184 = vector.extract_strided_slice %181 {offsets = [0, 16], sizes = [8, 1], strides = [1, 1]} : vector<8x17xf32> to vector<8x1xf32>
    %cst_71 = arith.constant 5.000000e-01 : f32
    %185 = vector.broadcast %cst_71 : f32 to vector<8x8xf32>
    %186 = arith.mulf %185, %183 : vector<8x8xf32>
    %187 = math.exp %186 : vector<8x8xf32>
    %c2 = arith.constant 2 : index
    %c0_72 = arith.constant 0 : index
    %c0_73 = arith.constant 0 : index
    %188 = vector.load %arg1[%c2, %c0_72, %c0_73] : memref<8x8x8xf32, #tpu.memory_space<vmem>>, vector<1x8x8xf32>
    %189 = vector.shape_cast %188 : vector<1x8x8xf32> to vector<8x8xf32>
    %190 = arith.mulf %187, %189 : vector<8x8xf32>
    %191 = arith.addf %182, %190 : vector<8x8xf32>
    %c16 = arith.constant 16 : index
    %c0_74 = arith.constant 0 : index
    %192 = vector.load %arg2[%c16, %c0_74] : memref<64x8xf32, #tpu.memory_space<vmem>>, vector<8x8xf32>
    %193 = arith.subf %192, %182 : vector<8x8xf32>
    %cst_75 = arith.constant 0.000000e+00 : f32
    %194 = vector.broadcast %cst_75 : f32 to vector<8x8xf32>
    %195 = arith.subf %194, %183 : vector<8x8xf32>
    %196 = math.exp %195 : vector<8x8xf32>
    %197 = arith.mulf %193, %196 : vector<8x8xf32>
    %198 = arith.mulf %197, %193 : vector<8x8xf32>
    %199 = arith.addf %183, %198 : vector<8x8xf32>
    %200 = arith.addf %133, %199 : vector<8x8xf32>
    %c16_76 = arith.constant 16 : index
    %c0_77 = arith.constant 0 : index
    %201 = vector.load %arg3[%c16_76, %c0_77] : memref<64x1xf32, #tpu.memory_space<vmem>>, vector<8x1xf32>
    %cst_78 = arith.constant 0.000000e+00 : f32
    %202 = vector.broadcast %cst_78 : f32 to vector<8x1xf32>
    %203 = arith.maximumf %184, %202 : vector<8x1xf32>
    %204 = arith.mulf %184, %201 : vector<8x1xf32>
    %205 = arith.subf %203, %204 : vector<8x1xf32>
    %206 = math.absf %184 : vector<8x1xf32>
    %cst_79 = arith.constant 0.000000e+00 : f32
    %207 = vector.broadcast %cst_79 : f32 to vector<8x1xf32>
    %208 = arith.subf %207, %206 : vector<8x1xf32>
    %209 = math.exp %208 : vector<8x1xf32>
    %210 = math.log1p %209 : vector<8x1xf32>
    %211 = arith.addf %205, %210 : vector<8x1xf32>
    %212 = arith.addf %145, %211 : vector<8x1xf32>
    %c16_80 = arith.constant 16 : index
    %c0_81 = arith.constant 0 : index
    %213 = vector.load %arg12[%c16_80, %c0_81] : memref<64x32xf32, #tpu.memory_space<vmem>>, vector<8x32xf32>
    tpu.vector_store %arg12[%c16_80, %c0_81], %170 {strides = array<i32>} : memref<64x32xf32, #tpu.memory_space<vmem>>, vector<8x32xf32>,
    %c16_82 = arith.constant 16 : index
    %c0_83 = arith.constant 0 : index
    %214 = vector.load %arg13[%c16_82, %c0_83] : memref<64x8xf32, #tpu.memory_space<vmem>>, vector<8x8xf32>
    tpu.vector_store %arg13[%c16_82, %c0_83], %182 {strides = array<i32>} : memref<64x8xf32, #tpu.memory_space<vmem>>, vector<8x8xf32>,
    %c16_84 = arith.constant 16 : index
    %c0_85 = arith.constant 0 : index
    %215 = vector.load %arg14[%c16_84, %c0_85] : memref<64x8xf32, #tpu.memory_space<vmem>>, vector<8x8xf32>
    tpu.vector_store %arg14[%c16_84, %c0_85], %183 {strides = array<i32>} : memref<64x8xf32, #tpu.memory_space<vmem>>, vector<8x8xf32>,
    %c16_86 = arith.constant 16 : index
    %c0_87 = arith.constant 0 : index
    %216 = vector.load %arg15[%c16_86, %c0_87] : memref<64x8xf32, #tpu.memory_space<vmem>>, vector<8x8xf32>
    tpu.vector_store %arg15[%c16_86, %c0_87], %191 {strides = array<i32>} : memref<64x8xf32, #tpu.memory_space<vmem>>, vector<8x8xf32>,
    %c16_88 = arith.constant 16 : index
    %c0_89 = arith.constant 0 : index
    %217 = vector.load %arg16[%c16_88, %c0_89] : memref<64x1xf32, #tpu.memory_space<vmem>>, vector<8x1xf32>
    tpu.vector_store %arg16[%c16_88, %c0_89], %184 {strides = array<i32>} : memref<64x1xf32, #tpu.memory_space<vmem>>, vector<8x1xf32>,
    %218 = arith.truncf %191 : vector<8x8xf32> to vector<8x8xbf16>
    %cst_90 = arith.constant dense<0.000000e+00> : vector<8x128xf32>
    %219 = tpu.matmul %218, %0, %cst_90 {dimension_numbers = #tpu.dot_dimension_numbers<[1], [0], [0], [1], [0, 0, 1, 1], [], []>} : vector<8x8xbf16>, vector<8x128xbf16>, vector<8x128xf32> -> vector<8x128xf32>
    %220 = arith.addf %219, %173 : vector<8x128xf32>
    %221 = vector.broadcast %3 : vector<1x128xf32> to vector<8x128xf32>
    %222 = arith.addf %220, %221 : vector<8x128xf32>
    %223 = arith.negf %222 : vector<8x128xf32>
    %224 = math.exp %223 : vector<8x128xf32>
    %cst_91 = arith.constant 1.000000e+00 : f32
    %225 = vector.broadcast %cst_91 : f32 to vector<8x128xf32>
    %226 = arith.addf %225, %224 : vector<8x128xf32>
    %227 = arith.divf %225, %226 : vector<8x128xf32>
    %228 = math.tanh %222 : vector<8x128xf32>
    %229 = vector.extract_strided_slice %227 {offsets = [0, 0], sizes = [8, 32], strides = [1, 1]} : vector<8x128xf32> to vector<8x32xf32>
    %230 = vector.extract_strided_slice %227 {offsets = [0, 32], sizes = [8, 32], strides = [1, 1]} : vector<8x128xf32> to vector<8x32xf32>
    %231 = vector.extract_strided_slice %228 {offsets = [0, 64], sizes = [8, 32], strides = [1, 1]} : vector<8x128xf32> to vector<8x32xf32>
    %232 = vector.extract_strided_slice %227 {offsets = [0, 96], sizes = [8, 32], strides = [1, 1]} : vector<8x128xf32> to vector<8x32xf32>
    %233 = arith.mulf %230, %168 : vector<8x32xf32>
    %234 = arith.mulf %229, %231 : vector<8x32xf32>
    %235 = arith.addf %233, %234 : vector<8x32xf32>
    %236 = math.tanh %235 : vector<8x32xf32>
    %237 = arith.mulf %232, %236 : vector<8x32xf32>
    %238 = arith.truncf %237 : vector<8x32xf32> to vector<8x32xbf16>
    %cst_92 = arith.constant dense<0.000000e+00> : vector<8x176xf32>
    %239 = tpu.matmul %238, %1, %cst_92 {dimension_numbers = #tpu.dot_dimension_numbers<[1], [0], [0], [1], [0, 0, 1, 1], [], []>} : vector<8x32xbf16>, vector<32x176xbf16>, vector<8x176xf32> -> vector<8x176xf32>
    %240 = vector.extract_strided_slice %239 {offsets = [0, 0], sizes = [8, 128], strides = [1, 1]} : vector<8x176xf32> to vector<8x128xf32>
    %241 = vector.extract_strided_slice %239 {offsets = [0, 128], sizes = [8, 48], strides = [1, 1]} : vector<8x176xf32> to vector<8x48xf32>
    %242 = vector.broadcast %4 : vector<1x48xf32> to vector<8x48xf32>
    %243 = arith.addf %241, %242 : vector<8x48xf32>
    %244 = math.tanh %243 : vector<8x48xf32>
    %245 = arith.truncf %244 : vector<8x48xf32> to vector<8x48xbf16>
    %cst_93 = arith.constant dense<0.000000e+00> : vector<8x17xf32>
    %246 = tpu.matmul %245, %2, %cst_93 {dimension_numbers = #tpu.dot_dimension_numbers<[1], [0], [0], [1], [0, 0, 1, 1], [], []>} : vector<8x48xbf16>, vector<48x17xbf16>, vector<8x17xf32> -> vector<8x17xf32>
    %247 = vector.broadcast %5 : vector<1x17xf32> to vector<8x17xf32>
    %248 = arith.addf %246, %247 : vector<8x17xf32>
    %249 = vector.extract_strided_slice %248 {offsets = [0, 0], sizes = [8, 8], strides = [1, 1]} : vector<8x17xf32> to vector<8x8xf32>
    %250 = vector.extract_strided_slice %248 {offsets = [0, 8], sizes = [8, 8], strides = [1, 1]} : vector<8x17xf32> to vector<8x8xf32>
    %251 = vector.extract_strided_slice %248 {offsets = [0, 16], sizes = [8, 1], strides = [1, 1]} : vector<8x17xf32> to vector<8x1xf32>
    %cst_94 = arith.constant 5.000000e-01 : f32
    %252 = vector.broadcast %cst_94 : f32 to vector<8x8xf32>
    %253 = arith.mulf %252, %250 : vector<8x8xf32>
    %254 = math.exp %253 : vector<8x8xf32>
    %c3 = arith.constant 3 : index
    %c0_95 = arith.constant 0 : index
    %c0_96 = arith.constant 0 : index
    %255 = vector.load %arg1[%c3, %c0_95, %c0_96] : memref<8x8x8xf32, #tpu.memory_space<vmem>>, vector<1x8x8xf32>
    %256 = vector.shape_cast %255 : vector<1x8x8xf32> to vector<8x8xf32>
    %257 = arith.mulf %254, %256 : vector<8x8xf32>
    %258 = arith.addf %249, %257 : vector<8x8xf32>
    %c24 = arith.constant 24 : index
    %c0_97 = arith.constant 0 : index
    %259 = vector.load %arg2[%c24, %c0_97] : memref<64x8xf32, #tpu.memory_space<vmem>>, vector<8x8xf32>
    %260 = arith.subf %259, %249 : vector<8x8xf32>
    %cst_98 = arith.constant 0.000000e+00 : f32
    %261 = vector.broadcast %cst_98 : f32 to vector<8x8xf32>
    %262 = arith.subf %261, %250 : vector<8x8xf32>
    %263 = math.exp %262 : vector<8x8xf32>
    %264 = arith.mulf %260, %263 : vector<8x8xf32>
    %265 = arith.mulf %264, %260 : vector<8x8xf32>
    %266 = arith.addf %250, %265 : vector<8x8xf32>
    %267 = arith.addf %200, %266 : vector<8x8xf32>
    %c24_99 = arith.constant 24 : index
    %c0_100 = arith.constant 0 : index
    %268 = vector.load %arg3[%c24_99, %c0_100] : memref<64x1xf32, #tpu.memory_space<vmem>>, vector<8x1xf32>
    %cst_101 = arith.constant 0.000000e+00 : f32
    %269 = vector.broadcast %cst_101 : f32 to vector<8x1xf32>
    %270 = arith.maximumf %251, %269 : vector<8x1xf32>
    %271 = arith.mulf %251, %268 : vector<8x1xf32>
    %272 = arith.subf %270, %271 : vector<8x1xf32>
    %273 = math.absf %251 : vector<8x1xf32>
    %cst_102 = arith.constant 0.000000e+00 : f32
    %274 = vector.broadcast %cst_102 : f32 to vector<8x1xf32>
    %275 = arith.subf %274, %273 : vector<8x1xf32>
    %276 = math.exp %275 : vector<8x1xf32>
    %277 = math.log1p %276 : vector<8x1xf32>
    %278 = arith.addf %272, %277 : vector<8x1xf32>
    %279 = arith.addf %212, %278 : vector<8x1xf32>
    %c24_103 = arith.constant 24 : index
    %c0_104 = arith.constant 0 : index
    %280 = vector.load %arg12[%c24_103, %c0_104] : memref<64x32xf32, #tpu.memory_space<vmem>>, vector<8x32xf32>
    tpu.vector_store %arg12[%c24_103, %c0_104], %237 {strides = array<i32>} : memref<64x32xf32, #tpu.memory_space<vmem>>, vector<8x32xf32>,
    %c24_105 = arith.constant 24 : index
    %c0_106 = arith.constant 0 : index
    %281 = vector.load %arg13[%c24_105, %c0_106] : memref<64x8xf32, #tpu.memory_space<vmem>>, vector<8x8xf32>
    tpu.vector_store %arg13[%c24_105, %c0_106], %249 {strides = array<i32>} : memref<64x8xf32, #tpu.memory_space<vmem>>, vector<8x8xf32>,
    %c24_107 = arith.constant 24 : index
    %c0_108 = arith.constant 0 : index
    %282 = vector.load %arg14[%c24_107, %c0_108] : memref<64x8xf32, #tpu.memory_space<vmem>>, vector<8x8xf32>
    tpu.vector_store %arg14[%c24_107, %c0_108], %250 {strides = array<i32>} : memref<64x8xf32, #tpu.memory_space<vmem>>, vector<8x8xf32>,
    %c24_109 = arith.constant 24 : index
    %c0_110 = arith.constant 0 : index
    %283 = vector.load %arg15[%c24_109, %c0_110] : memref<64x8xf32, #tpu.memory_space<vmem>>, vector<8x8xf32>
    tpu.vector_store %arg15[%c24_109, %c0_110], %258 {strides = array<i32>} : memref<64x8xf32, #tpu.memory_space<vmem>>, vector<8x8xf32>,
    %c24_111 = arith.constant 24 : index
    %c0_112 = arith.constant 0 : index
    %284 = vector.load %arg16[%c24_111, %c0_112] : memref<64x1xf32, #tpu.memory_space<vmem>>, vector<8x1xf32>
    tpu.vector_store %arg16[%c24_111, %c0_112], %251 {strides = array<i32>} : memref<64x1xf32, #tpu.memory_space<vmem>>, vector<8x1xf32>,
    %285 = arith.truncf %258 : vector<8x8xf32> to vector<8x8xbf16>
    %cst_113 = arith.constant dense<0.000000e+00> : vector<8x128xf32>
    %286 = tpu.matmul %285, %0, %cst_113 {dimension_numbers = #tpu.dot_dimension_numbers<[1], [0], [0], [1], [0, 0, 1, 1], [], []>} : vector<8x8xbf16>, vector<8x128xbf16>, vector<8x128xf32> -> vector<8x128xf32>
    %287 = arith.addf %286, %240 : vector<8x128xf32>
    %288 = vector.broadcast %3 : vector<1x128xf32> to vector<8x128xf32>
    %289 = arith.addf %287, %288 : vector<8x128xf32>
    %290 = arith.negf %289 : vector<8x128xf32>
    %291 = math.exp %290 : vector<8x128xf32>
    %cst_114 = arith.constant 1.000000e+00 : f32
    %292 = vector.broadcast %cst_114 : f32 to vector<8x128xf32>
    %293 = arith.addf %292, %291 : vector<8x128xf32>
    %294 = arith.divf %292, %293 : vector<8x128xf32>
    %295 = math.tanh %289 : vector<8x128xf32>
    %296 = vector.extract_strided_slice %294 {offsets = [0, 0], sizes = [8, 32], strides = [1, 1]} : vector<8x128xf32> to vector<8x32xf32>
    %297 = vector.extract_strided_slice %294 {offsets = [0, 32], sizes = [8, 32], strides = [1, 1]} : vector<8x128xf32> to vector<8x32xf32>
    %298 = vector.extract_strided_slice %295 {offsets = [0, 64], sizes = [8, 32], strides = [1, 1]} : vector<8x128xf32> to vector<8x32xf32>
    %299 = vector.extract_strided_slice %294 {offsets = [0, 96], sizes = [8, 32], strides = [1, 1]} : vector<8x128xf32> to vector<8x32xf32>
    %300 = arith.mulf %297, %235 : vector<8x32xf32>
    %301 = arith.mulf %296, %298 : vector<8x32xf32>
    %302 = arith.addf %300, %301 : vector<8x32xf32>
    %303 = math.tanh %302 : vector<8x32xf32>
    %304 = arith.mulf %299, %303 : vector<8x32xf32>
    %305 = arith.truncf %304 : vector<8x32xf32> to vector<8x32xbf16>
    %cst_115 = arith.constant dense<0.000000e+00> : vector<8x176xf32>
    %306 = tpu.matmul %305, %1, %cst_115 {dimension_numbers = #tpu.dot_dimension_numbers<[1], [0], [0], [1], [0, 0, 1, 1], [], []>} : vector<8x32xbf16>, vector<32x176xbf16>, vector<8x176xf32> -> vector<8x176xf32>
    %307 = vector.extract_strided_slice %306 {offsets = [0, 0], sizes = [8, 128], strides = [1, 1]} : vector<8x176xf32> to vector<8x128xf32>
    %308 = vector.extract_strided_slice %306 {offsets = [0, 128], sizes = [8, 48], strides = [1, 1]} : vector<8x176xf32> to vector<8x48xf32>
    %309 = vector.broadcast %4 : vector<1x48xf32> to vector<8x48xf32>
    %310 = arith.addf %308, %309 : vector<8x48xf32>
    %311 = math.tanh %310 : vector<8x48xf32>
    %312 = arith.truncf %311 : vector<8x48xf32> to vector<8x48xbf16>
    %cst_116 = arith.constant dense<0.000000e+00> : vector<8x17xf32>
    %313 = tpu.matmul %312, %2, %cst_116 {dimension_numbers = #tpu.dot_dimension_numbers<[1], [0], [0], [1], [0, 0, 1, 1], [], []>} : vector<8x48xbf16>, vector<48x17xbf16>, vector<8x17xf32> -> vector<8x17xf32>
    %314 = vector.broadcast %5 : vector<1x17xf32> to vector<8x17xf32>
    %315 = arith.addf %313, %314 : vector<8x17xf32>
    %316 = vector.extract_strided_slice %315 {offsets = [0, 0], sizes = [8, 8], strides = [1, 1]} : vector<8x17xf32> to vector<8x8xf32>
    %317 = vector.extract_strided_slice %315 {offsets = [0, 8], sizes = [8, 8], strides = [1, 1]} : vector<8x17xf32> to vector<8x8xf32>
    %318 = vector.extract_strided_slice %315 {offsets = [0, 16], sizes = [8, 1], strides = [1, 1]} : vector<8x17xf32> to vector<8x1xf32>
    %cst_117 = arith.constant 5.000000e-01 : f32
    %319 = vector.broadcast %cst_117 : f32 to vector<8x8xf32>
    %320 = arith.mulf %319, %317 : vector<8x8xf32>
    %321 = math.exp %320 : vector<8x8xf32>
    %c4 = arith.constant 4 : index
    %c0_118 = arith.constant 0 : index
    %c0_119 = arith.constant 0 : index
    %322 = vector.load %arg1[%c4, %c0_118, %c0_119] : memref<8x8x8xf32, #tpu.memory_space<vmem>>, vector<1x8x8xf32>
    %323 = vector.shape_cast %322 : vector<1x8x8xf32> to vector<8x8xf32>
    %324 = arith.mulf %321, %323 : vector<8x8xf32>
    %325 = arith.addf %316, %324 : vector<8x8xf32>
    %c32 = arith.constant 32 : index
    %c0_120 = arith.constant 0 : index
    %326 = vector.load %arg2[%c32, %c0_120] : memref<64x8xf32, #tpu.memory_space<vmem>>, vector<8x8xf32>
    %327 = arith.subf %326, %316 : vector<8x8xf32>
    %cst_121 = arith.constant 0.000000e+00 : f32
    %328 = vector.broadcast %cst_121 : f32 to vector<8x8xf32>
    %329 = arith.subf %328, %317 : vector<8x8xf32>
    %330 = math.exp %329 : vector<8x8xf32>
    %331 = arith.mulf %327, %330 : vector<8x8xf32>
    %332 = arith.mulf %331, %327 : vector<8x8xf32>
    %333 = arith.addf %317, %332 : vector<8x8xf32>
    %334 = arith.addf %267, %333 : vector<8x8xf32>
    %c32_122 = arith.constant 32 : index
    %c0_123 = arith.constant 0 : index
    %335 = vector.load %arg3[%c32_122, %c0_123] : memref<64x1xf32, #tpu.memory_space<vmem>>, vector<8x1xf32>
    %cst_124 = arith.constant 0.000000e+00 : f32
    %336 = vector.broadcast %cst_124 : f32 to vector<8x1xf32>
    %337 = arith.maximumf %318, %336 : vector<8x1xf32>
    %338 = arith.mulf %318, %335 : vector<8x1xf32>
    %339 = arith.subf %337, %338 : vector<8x1xf32>
    %340 = math.absf %318 : vector<8x1xf32>
    %cst_125 = arith.constant 0.000000e+00 : f32
    %341 = vector.broadcast %cst_125 : f32 to vector<8x1xf32>
    %342 = arith.subf %341, %340 : vector<8x1xf32>
    %343 = math.exp %342 : vector<8x1xf32>
    %344 = math.log1p %343 : vector<8x1xf32>
    %345 = arith.addf %339, %344 : vector<8x1xf32>
    %346 = arith.addf %279, %345 : vector<8x1xf32>
    %c32_126 = arith.constant 32 : index
    %c0_127 = arith.constant 0 : index
    %347 = vector.load %arg12[%c32_126, %c0_127] : memref<64x32xf32, #tpu.memory_space<vmem>>, vector<8x32xf32>
    tpu.vector_store %arg12[%c32_126, %c0_127], %304 {strides = array<i32>} : memref<64x32xf32, #tpu.memory_space<vmem>>, vector<8x32xf32>,
    %c32_128 = arith.constant 32 : index
    %c0_129 = arith.constant 0 : index
    %348 = vector.load %arg13[%c32_128, %c0_129] : memref<64x8xf32, #tpu.memory_space<vmem>>, vector<8x8xf32>
    tpu.vector_store %arg13[%c32_128, %c0_129], %316 {strides = array<i32>} : memref<64x8xf32, #tpu.memory_space<vmem>>, vector<8x8xf32>,
    %c32_130 = arith.constant 32 : index
    %c0_131 = arith.constant 0 : index
    %349 = vector.load %arg14[%c32_130, %c0_131] : memref<64x8xf32, #tpu.memory_space<vmem>>, vector<8x8xf32>
    tpu.vector_store %arg14[%c32_130, %c0_131], %317 {strides = array<i32>} : memref<64x8xf32, #tpu.memory_space<vmem>>, vector<8x8xf32>,
    %c32_132 = arith.constant 32 : index
    %c0_133 = arith.constant 0 : index
    %350 = vector.load %arg15[%c32_132, %c0_133] : memref<64x8xf32, #tpu.memory_space<vmem>>, vector<8x8xf32>
    tpu.vector_store %arg15[%c32_132, %c0_133], %325 {strides = array<i32>} : memref<64x8xf32, #tpu.memory_space<vmem>>, vector<8x8xf32>,
    %c32_134 = arith.constant 32 : index
    %c0_135 = arith.constant 0 : index
    %351 = vector.load %arg16[%c32_134, %c0_135] : memref<64x1xf32, #tpu.memory_space<vmem>>, vector<8x1xf32>
    tpu.vector_store %arg16[%c32_134, %c0_135], %318 {strides = array<i32>} : memref<64x1xf32, #tpu.memory_space<vmem>>, vector<8x1xf32>,
    %352 = arith.truncf %325 : vector<8x8xf32> to vector<8x8xbf16>
    %cst_136 = arith.constant dense<0.000000e+00> : vector<8x128xf32>
    %353 = tpu.matmul %352, %0, %cst_136 {dimension_numbers = #tpu.dot_dimension_numbers<[1], [0], [0], [1], [0, 0, 1, 1], [], []>} : vector<8x8xbf16>, vector<8x128xbf16>, vector<8x128xf32> -> vector<8x128xf32>
    %354 = arith.addf %353, %307 : vector<8x128xf32>
    %355 = vector.broadcast %3 : vector<1x128xf32> to vector<8x128xf32>
    %356 = arith.addf %354, %355 : vector<8x128xf32>
    %357 = arith.negf %356 : vector<8x128xf32>
    %358 = math.exp %357 : vector<8x128xf32>
    %cst_137 = arith.constant 1.000000e+00 : f32
    %359 = vector.broadcast %cst_137 : f32 to vector<8x128xf32>
    %360 = arith.addf %359, %358 : vector<8x128xf32>
    %361 = arith.divf %359, %360 : vector<8x128xf32>
    %362 = math.tanh %356 : vector<8x128xf32>
    %363 = vector.extract_strided_slice %361 {offsets = [0, 0], sizes = [8, 32], strides = [1, 1]} : vector<8x128xf32> to vector<8x32xf32>
    %364 = vector.extract_strided_slice %361 {offsets = [0, 32], sizes = [8, 32], strides = [1, 1]} : vector<8x128xf32> to vector<8x32xf32>
    %365 = vector.extract_strided_slice %362 {offsets = [0, 64], sizes = [8, 32], strides = [1, 1]} : vector<8x128xf32> to vector<8x32xf32>
    %366 = vector.extract_strided_slice %361 {offsets = [0, 96], sizes = [8, 32], strides = [1, 1]} : vector<8x128xf32> to vector<8x32xf32>
    %367 = arith.mulf %364, %302 : vector<8x32xf32>
    %368 = arith.mulf %363, %365 : vector<8x32xf32>
    %369 = arith.addf %367, %368 : vector<8x32xf32>
    %370 = math.tanh %369 : vector<8x32xf32>
    %371 = arith.mulf %366, %370 : vector<8x32xf32>
    %372 = arith.truncf %371 : vector<8x32xf32> to vector<8x32xbf16>
    %cst_138 = arith.constant dense<0.000000e+00> : vector<8x176xf32>
    %373 = tpu.matmul %372, %1, %cst_138 {dimension_numbers = #tpu.dot_dimension_numbers<[1], [0], [0], [1], [0, 0, 1, 1], [], []>} : vector<8x32xbf16>, vector<32x176xbf16>, vector<8x176xf32> -> vector<8x176xf32>
    %374 = vector.extract_strided_slice %373 {offsets = [0, 0], sizes = [8, 128], strides = [1, 1]} : vector<8x176xf32> to vector<8x128xf32>
    %375 = vector.extract_strided_slice %373 {offsets = [0, 128], sizes = [8, 48], strides = [1, 1]} : vector<8x176xf32> to vector<8x48xf32>
    %376 = vector.broadcast %4 : vector<1x48xf32> to vector<8x48xf32>
    %377 = arith.addf %375, %376 : vector<8x48xf32>
    %378 = math.tanh %377 : vector<8x48xf32>
    %379 = arith.truncf %378 : vector<8x48xf32> to vector<8x48xbf16>
    %cst_139 = arith.constant dense<0.000000e+00> : vector<8x17xf32>
    %380 = tpu.matmul %379, %2, %cst_139 {dimension_numbers = #tpu.dot_dimension_numbers<[1], [0], [0], [1], [0, 0, 1, 1], [], []>} : vector<8x48xbf16>, vector<48x17xbf16>, vector<8x17xf32> -> vector<8x17xf32>
    %381 = vector.broadcast %5 : vector<1x17xf32> to vector<8x17xf32>
    %382 = arith.addf %380, %381 : vector<8x17xf32>
    %383 = vector.extract_strided_slice %382 {offsets = [0, 0], sizes = [8, 8], strides = [1, 1]} : vector<8x17xf32> to vector<8x8xf32>
    %384 = vector.extract_strided_slice %382 {offsets = [0, 8], sizes = [8, 8], strides = [1, 1]} : vector<8x17xf32> to vector<8x8xf32>
    %385 = vector.extract_strided_slice %382 {offsets = [0, 16], sizes = [8, 1], strides = [1, 1]} : vector<8x17xf32> to vector<8x1xf32>
    %cst_140 = arith.constant 5.000000e-01 : f32
    %386 = vector.broadcast %cst_140 : f32 to vector<8x8xf32>
    %387 = arith.mulf %386, %384 : vector<8x8xf32>
    %388 = math.exp %387 : vector<8x8xf32>
    %c5 = arith.constant 5 : index
    %c0_141 = arith.constant 0 : index
    %c0_142 = arith.constant 0 : index
    %389 = vector.load %arg1[%c5, %c0_141, %c0_142] : memref<8x8x8xf32, #tpu.memory_space<vmem>>, vector<1x8x8xf32>
    %390 = vector.shape_cast %389 : vector<1x8x8xf32> to vector<8x8xf32>
    %391 = arith.mulf %388, %390 : vector<8x8xf32>
    %392 = arith.addf %383, %391 : vector<8x8xf32>
    %c40 = arith.constant 40 : index
    %c0_143 = arith.constant 0 : index
    %393 = vector.load %arg2[%c40, %c0_143] : memref<64x8xf32, #tpu.memory_space<vmem>>, vector<8x8xf32>
    %394 = arith.subf %393, %383 : vector<8x8xf32>
    %cst_144 = arith.constant 0.000000e+00 : f32
    %395 = vector.broadcast %cst_144 : f32 to vector<8x8xf32>
    %396 = arith.subf %395, %384 : vector<8x8xf32>
    %397 = math.exp %396 : vector<8x8xf32>
    %398 = arith.mulf %394, %397 : vector<8x8xf32>
    %399 = arith.mulf %398, %394 : vector<8x8xf32>
    %400 = arith.addf %384, %399 : vector<8x8xf32>
    %401 = arith.addf %334, %400 : vector<8x8xf32>
    %c40_145 = arith.constant 40 : index
    %c0_146 = arith.constant 0 : index
    %402 = vector.load %arg3[%c40_145, %c0_146] : memref<64x1xf32, #tpu.memory_space<vmem>>, vector<8x1xf32>
    %cst_147 = arith.constant 0.000000e+00 : f32
    %403 = vector.broadcast %cst_147 : f32 to vector<8x1xf32>
    %404 = arith.maximumf %385, %403 : vector<8x1xf32>
    %405 = arith.mulf %385, %402 : vector<8x1xf32>
    %406 = arith.subf %404, %405 : vector<8x1xf32>
    %407 = math.absf %385 : vector<8x1xf32>
    %cst_148 = arith.constant 0.000000e+00 : f32
    %408 = vector.broadcast %cst_148 : f32 to vector<8x1xf32>
    %409 = arith.subf %408, %407 : vector<8x1xf32>
    %410 = math.exp %409 : vector<8x1xf32>
    %411 = math.log1p %410 : vector<8x1xf32>
    %412 = arith.addf %406, %411 : vector<8x1xf32>
    %413 = arith.addf %346, %412 : vector<8x1xf32>
    %c40_149 = arith.constant 40 : index
    %c0_150 = arith.constant 0 : index
    %414 = vector.load %arg12[%c40_149, %c0_150] : memref<64x32xf32, #tpu.memory_space<vmem>>, vector<8x32xf32>
    tpu.vector_store %arg12[%c40_149, %c0_150], %371 {strides = array<i32>} : memref<64x32xf32, #tpu.memory_space<vmem>>, vector<8x32xf32>,
    %c40_151 = arith.constant 40 : index
    %c0_152 = arith.constant 0 : index
    %415 = vector.load %arg13[%c40_151, %c0_152] : memref<64x8xf32, #tpu.memory_space<vmem>>, vector<8x8xf32>
    tpu.vector_store %arg13[%c40_151, %c0_152], %383 {strides = array<i32>} : memref<64x8xf32, #tpu.memory_space<vmem>>, vector<8x8xf32>,
    %c40_153 = arith.constant 40 : index
    %c0_154 = arith.constant 0 : index
    %416 = vector.load %arg14[%c40_153, %c0_154] : memref<64x8xf32, #tpu.memory_space<vmem>>, vector<8x8xf32>
    tpu.vector_store %arg14[%c40_153, %c0_154], %384 {strides = array<i32>} : memref<64x8xf32, #tpu.memory_space<vmem>>, vector<8x8xf32>,
    %c40_155 = arith.constant 40 : index
    %c0_156 = arith.constant 0 : index
    %417 = vector.load %arg15[%c40_155, %c0_156] : memref<64x8xf32, #tpu.memory_space<vmem>>, vector<8x8xf32>
    tpu.vector_store %arg15[%c40_155, %c0_156], %392 {strides = array<i32>} : memref<64x8xf32, #tpu.memory_space<vmem>>, vector<8x8xf32>,
    %c40_157 = arith.constant 40 : index
    %c0_158 = arith.constant 0 : index
    %418 = vector.load %arg16[%c40_157, %c0_158] : memref<64x1xf32, #tpu.memory_space<vmem>>, vector<8x1xf32>
    tpu.vector_store %arg16[%c40_157, %c0_158], %385 {strides = array<i32>} : memref<64x1xf32, #tpu.memory_space<vmem>>, vector<8x1xf32>,
    %419 = arith.truncf %392 : vector<8x8xf32> to vector<8x8xbf16>
    %cst_159 = arith.constant dense<0.000000e+00> : vector<8x128xf32>
    %420 = tpu.matmul %419, %0, %cst_159 {dimension_numbers = #tpu.dot_dimension_numbers<[1], [0], [0], [1], [0, 0, 1, 1], [], []>} : vector<8x8xbf16>, vector<8x128xbf16>, vector<8x128xf32> -> vector<8x128xf32>
    %421 = arith.addf %420, %374 : vector<8x128xf32>
    %422 = vector.broadcast %3 : vector<1x128xf32> to vector<8x128xf32>
    %423 = arith.addf %421, %422 : vector<8x128xf32>
    %424 = arith.negf %423 : vector<8x128xf32>
    %425 = math.exp %424 : vector<8x128xf32>
    %cst_160 = arith.constant 1.000000e+00 : f32
    %426 = vector.broadcast %cst_160 : f32 to vector<8x128xf32>
    %427 = arith.addf %426, %425 : vector<8x128xf32>
    %428 = arith.divf %426, %427 : vector<8x128xf32>
    %429 = math.tanh %423 : vector<8x128xf32>
    %430 = vector.extract_strided_slice %428 {offsets = [0, 0], sizes = [8, 32], strides = [1, 1]} : vector<8x128xf32> to vector<8x32xf32>
    %431 = vector.extract_strided_slice %428 {offsets = [0, 32], sizes = [8, 32], strides = [1, 1]} : vector<8x128xf32> to vector<8x32xf32>
    %432 = vector.extract_strided_slice %429 {offsets = [0, 64], sizes = [8, 32], strides = [1, 1]} : vector<8x128xf32> to vector<8x32xf32>
    %433 = vector.extract_strided_slice %428 {offsets = [0, 96], sizes = [8, 32], strides = [1, 1]} : vector<8x128xf32> to vector<8x32xf32>
    %434 = arith.mulf %431, %369 : vector<8x32xf32>
    %435 = arith.mulf %430, %432 : vector<8x32xf32>
    %436 = arith.addf %434, %435 : vector<8x32xf32>
    %437 = math.tanh %436 : vector<8x32xf32>
    %438 = arith.mulf %433, %437 : vector<8x32xf32>
    %439 = arith.truncf %438 : vector<8x32xf32> to vector<8x32xbf16>
    %cst_161 = arith.constant dense<0.000000e+00> : vector<8x176xf32>
    %440 = tpu.matmul %439, %1, %cst_161 {dimension_numbers = #tpu.dot_dimension_numbers<[1], [0], [0], [1], [0, 0, 1, 1], [], []>} : vector<8x32xbf16>, vector<32x176xbf16>, vector<8x176xf32> -> vector<8x176xf32>
    %441 = vector.extract_strided_slice %440 {offsets = [0, 0], sizes = [8, 128], strides = [1, 1]} : vector<8x176xf32> to vector<8x128xf32>
    %442 = vector.extract_strided_slice %440 {offsets = [0, 128], sizes = [8, 48], strides = [1, 1]} : vector<8x176xf32> to vector<8x48xf32>
    %443 = vector.broadcast %4 : vector<1x48xf32> to vector<8x48xf32>
    %444 = arith.addf %442, %443 : vector<8x48xf32>
    %445 = math.tanh %444 : vector<8x48xf32>
    %446 = arith.truncf %445 : vector<8x48xf32> to vector<8x48xbf16>
    %cst_162 = arith.constant dense<0.000000e+00> : vector<8x17xf32>
    %447 = tpu.matmul %446, %2, %cst_162 {dimension_numbers = #tpu.dot_dimension_numbers<[1], [0], [0], [1], [0, 0, 1, 1], [], []>} : vector<8x48xbf16>, vector<48x17xbf16>, vector<8x17xf32> -> vector<8x17xf32>
    %448 = vector.broadcast %5 : vector<1x17xf32> to vector<8x17xf32>
    %449 = arith.addf %447, %448 : vector<8x17xf32>
    %450 = vector.extract_strided_slice %449 {offsets = [0, 0], sizes = [8, 8], strides = [1, 1]} : vector<8x17xf32> to vector<8x8xf32>
    %451 = vector.extract_strided_slice %449 {offsets = [0, 8], sizes = [8, 8], strides = [1, 1]} : vector<8x17xf32> to vector<8x8xf32>
    %452 = vector.extract_strided_slice %449 {offsets = [0, 16], sizes = [8, 1], strides = [1, 1]} : vector<8x17xf32> to vector<8x1xf32>
    %cst_163 = arith.constant 5.000000e-01 : f32
    %453 = vector.broadcast %cst_163 : f32 to vector<8x8xf32>
    %454 = arith.mulf %453, %451 : vector<8x8xf32>
    %455 = math.exp %454 : vector<8x8xf32>
    %c6 = arith.constant 6 : index
    %c0_164 = arith.constant 0 : index
    %c0_165 = arith.constant 0 : index
    %456 = vector.load %arg1[%c6, %c0_164, %c0_165] : memref<8x8x8xf32, #tpu.memory_space<vmem>>, vector<1x8x8xf32>
    %457 = vector.shape_cast %456 : vector<1x8x8xf32> to vector<8x8xf32>
    %458 = arith.mulf %455, %457 : vector<8x8xf32>
    %459 = arith.addf %450, %458 : vector<8x8xf32>
    %c48 = arith.constant 48 : index
    %c0_166 = arith.constant 0 : index
    %460 = vector.load %arg2[%c48, %c0_166] : memref<64x8xf32, #tpu.memory_space<vmem>>, vector<8x8xf32>
    %461 = arith.subf %460, %450 : vector<8x8xf32>
    %cst_167 = arith.constant 0.000000e+00 : f32
    %462 = vector.broadcast %cst_167 : f32 to vector<8x8xf32>
    %463 = arith.subf %462, %451 : vector<8x8xf32>
    %464 = math.exp %463 : vector<8x8xf32>
    %465 = arith.mulf %461, %464 : vector<8x8xf32>
    %466 = arith.mulf %465, %461 : vector<8x8xf32>
    %467 = arith.addf %451, %466 : vector<8x8xf32>
    %468 = arith.addf %401, %467 : vector<8x8xf32>
    %c48_168 = arith.constant 48 : index
    %c0_169 = arith.constant 0 : index
    %469 = vector.load %arg3[%c48_168, %c0_169] : memref<64x1xf32, #tpu.memory_space<vmem>>, vector<8x1xf32>
    %cst_170 = arith.constant 0.000000e+00 : f32
    %470 = vector.broadcast %cst_170 : f32 to vector<8x1xf32>
    %471 = arith.maximumf %452, %470 : vector<8x1xf32>
    %472 = arith.mulf %452, %469 : vector<8x1xf32>
    %473 = arith.subf %471, %472 : vector<8x1xf32>
    %474 = math.absf %452 : vector<8x1xf32>
    %cst_171 = arith.constant 0.000000e+00 : f32
    %475 = vector.broadcast %cst_171 : f32 to vector<8x1xf32>
    %476 = arith.subf %475, %474 : vector<8x1xf32>
    %477 = math.exp %476 : vector<8x1xf32>
    %478 = math.log1p %477 : vector<8x1xf32>
    %479 = arith.addf %473, %478 : vector<8x1xf32>
    %480 = arith.addf %413, %479 : vector<8x1xf32>
    %c48_172 = arith.constant 48 : index
    %c0_173 = arith.constant 0 : index
    %481 = vector.load %arg12[%c48_172, %c0_173] : memref<64x32xf32, #tpu.memory_space<vmem>>, vector<8x32xf32>
    tpu.vector_store %arg12[%c48_172, %c0_173], %438 {strides = array<i32>} : memref<64x32xf32, #tpu.memory_space<vmem>>, vector<8x32xf32>,
    %c48_174 = arith.constant 48 : index
    %c0_175 = arith.constant 0 : index
    %482 = vector.load %arg13[%c48_174, %c0_175] : memref<64x8xf32, #tpu.memory_space<vmem>>, vector<8x8xf32>
    tpu.vector_store %arg13[%c48_174, %c0_175], %450 {strides = array<i32>} : memref<64x8xf32, #tpu.memory_space<vmem>>, vector<8x8xf32>,
    %c48_176 = arith.constant 48 : index
    %c0_177 = arith.constant 0 : index
    %483 = vector.load %arg14[%c48_176, %c0_177] : memref<64x8xf32, #tpu.memory_space<vmem>>, vector<8x8xf32>
    tpu.vector_store %arg14[%c48_176, %c0_177], %451 {strides = array<i32>} : memref<64x8xf32, #tpu.memory_space<vmem>>, vector<8x8xf32>,
    %c48_178 = arith.constant 48 : index
    %c0_179 = arith.constant 0 : index
    %484 = vector.load %arg15[%c48_178, %c0_179] : memref<64x8xf32, #tpu.memory_space<vmem>>, vector<8x8xf32>
    tpu.vector_store %arg15[%c48_178, %c0_179], %459 {strides = array<i32>} : memref<64x8xf32, #tpu.memory_space<vmem>>, vector<8x8xf32>,
    %c48_180 = arith.constant 48 : index
    %c0_181 = arith.constant 0 : index
    %485 = vector.load %arg16[%c48_180, %c0_181] : memref<64x1xf32, #tpu.memory_space<vmem>>, vector<8x1xf32>
    tpu.vector_store %arg16[%c48_180, %c0_181], %452 {strides = array<i32>} : memref<64x1xf32, #tpu.memory_space<vmem>>, vector<8x1xf32>,
    %486 = arith.truncf %459 : vector<8x8xf32> to vector<8x8xbf16>
    %cst_182 = arith.constant dense<0.000000e+00> : vector<8x128xf32>
    %487 = tpu.matmul %486, %0, %cst_182 {dimension_numbers = #tpu.dot_dimension_numbers<[1], [0], [0], [1], [0, 0, 1, 1], [], []>} : vector<8x8xbf16>, vector<8x128xbf16>, vector<8x128xf32> -> vector<8x128xf32>
    %488 = arith.addf %487, %441 : vector<8x128xf32>
    %489 = vector.broadcast %3 : vector<1x128xf32> to vector<8x128xf32>
    %490 = arith.addf %488, %489 : vector<8x128xf32>
    %491 = arith.negf %490 : vector<8x128xf32>
    %492 = math.exp %491 : vector<8x128xf32>
    %cst_183 = arith.constant 1.000000e+00 : f32
    %493 = vector.broadcast %cst_183 : f32 to vector<8x128xf32>
    %494 = arith.addf %493, %492 : vector<8x128xf32>
    %495 = arith.divf %493, %494 : vector<8x128xf32>
    %496 = math.tanh %490 : vector<8x128xf32>
    %497 = vector.extract_strided_slice %495 {offsets = [0, 0], sizes = [8, 32], strides = [1, 1]} : vector<8x128xf32> to vector<8x32xf32>
    %498 = vector.extract_strided_slice %495 {offsets = [0, 32], sizes = [8, 32], strides = [1, 1]} : vector<8x128xf32> to vector<8x32xf32>
    %499 = vector.extract_strided_slice %496 {offsets = [0, 64], sizes = [8, 32], strides = [1, 1]} : vector<8x128xf32> to vector<8x32xf32>
    %500 = vector.extract_strided_slice %495 {offsets = [0, 96], sizes = [8, 32], strides = [1, 1]} : vector<8x128xf32> to vector<8x32xf32>
    %501 = arith.mulf %498, %436 : vector<8x32xf32>
    %502 = arith.mulf %497, %499 : vector<8x32xf32>
    %503 = arith.addf %501, %502 : vector<8x32xf32>
    %504 = math.tanh %503 : vector<8x32xf32>
    %505 = arith.mulf %500, %504 : vector<8x32xf32>
    %506 = arith.truncf %505 : vector<8x32xf32> to vector<8x32xbf16>
    %cst_184 = arith.constant dense<0.000000e+00> : vector<8x176xf32>
    %507 = tpu.matmul %506, %1, %cst_184 {dimension_numbers = #tpu.dot_dimension_numbers<[1], [0], [0], [1], [0, 0, 1, 1], [], []>} : vector<8x32xbf16>, vector<32x176xbf16>, vector<8x176xf32> -> vector<8x176xf32>
    %508 = vector.extract_strided_slice %507 {offsets = [0, 128], sizes = [8, 48], strides = [1, 1]} : vector<8x176xf32> to vector<8x48xf32>
    %509 = vector.broadcast %4 : vector<1x48xf32> to vector<8x48xf32>
    %510 = arith.addf %508, %509 : vector<8x48xf32>
    %511 = math.tanh %510 : vector<8x48xf32>
    %512 = arith.truncf %511 : vector<8x48xf32> to vector<8x48xbf16>
    %cst_185 = arith.constant dense<0.000000e+00> : vector<8x17xf32>
    %513 = tpu.matmul %512, %2, %cst_185 {dimension_numbers = #tpu.dot_dimension_numbers<[1], [0], [0], [1], [0, 0, 1, 1], [], []>} : vector<8x48xbf16>, vector<48x17xbf16>, vector<8x17xf32> -> vector<8x17xf32>
    %514 = vector.broadcast %5 : vector<1x17xf32> to vector<8x17xf32>
    %515 = arith.addf %513, %514 : vector<8x17xf32>
    %516 = vector.extract_strided_slice %515 {offsets = [0, 0], sizes = [8, 8], strides = [1, 1]} : vector<8x17xf32> to vector<8x8xf32>
    %517 = vector.extract_strided_slice %515 {offsets = [0, 8], sizes = [8, 8], strides = [1, 1]} : vector<8x17xf32> to vector<8x8xf32>
    %518 = vector.extract_strided_slice %515 {offsets = [0, 16], sizes = [8, 1], strides = [1, 1]} : vector<8x17xf32> to vector<8x1xf32>
    %cst_186 = arith.constant 5.000000e-01 : f32
    %519 = vector.broadcast %cst_186 : f32 to vector<8x8xf32>
    %520 = arith.mulf %519, %517 : vector<8x8xf32>
    %521 = math.exp %520 : vector<8x8xf32>
    %c7 = arith.constant 7 : index
    %c0_187 = arith.constant 0 : index
    %c0_188 = arith.constant 0 : index
    %522 = vector.load %arg1[%c7, %c0_187, %c0_188] : memref<8x8x8xf32, #tpu.memory_space<vmem>>, vector<1x8x8xf32>
    %523 = vector.shape_cast %522 : vector<1x8x8xf32> to vector<8x8xf32>
    %524 = arith.mulf %521, %523 : vector<8x8xf32>
    %525 = arith.addf %516, %524 : vector<8x8xf32>
    %c56 = arith.constant 56 : index
    %c0_189 = arith.constant 0 : index
    %526 = vector.load %arg2[%c56, %c0_189] : memref<64x8xf32, #tpu.memory_space<vmem>>, vector<8x8xf32>
    %527 = arith.subf %526, %516 : vector<8x8xf32>
    %cst_190 = arith.constant 0.000000e+00 : f32
    %528 = vector.broadcast %cst_190 : f32 to vector<8x8xf32>
    %529 = arith.subf %528, %517 : vector<8x8xf32>
    %530 = math.exp %529 : vector<8x8xf32>
    %531 = arith.mulf %527, %530 : vector<8x8xf32>
    %532 = arith.mulf %531, %527 : vector<8x8xf32>
    %533 = arith.addf %517, %532 : vector<8x8xf32>
    %534 = arith.addf %468, %533 : vector<8x8xf32>
    %c56_191 = arith.constant 56 : index
    %c0_192 = arith.constant 0 : index
    %535 = vector.load %arg3[%c56_191, %c0_192] : memref<64x1xf32, #tpu.memory_space<vmem>>, vector<8x1xf32>
    %cst_193 = arith.constant 0.000000e+00 : f32
    %536 = vector.broadcast %cst_193 : f32 to vector<8x1xf32>
    %537 = arith.maximumf %518, %536 : vector<8x1xf32>
    %538 = arith.mulf %518, %535 : vector<8x1xf32>
    %539 = arith.subf %537, %538 : vector<8x1xf32>
    %540 = math.absf %518 : vector<8x1xf32>
    %cst_194 = arith.constant 0.000000e+00 : f32
    %541 = vector.broadcast %cst_194 : f32 to vector<8x1xf32>
    %542 = arith.subf %541, %540 : vector<8x1xf32>
    %543 = math.exp %542 : vector<8x1xf32>
    %544 = math.log1p %543 : vector<8x1xf32>
    %545 = arith.addf %539, %544 : vector<8x1xf32>
    %546 = arith.addf %480, %545 : vector<8x1xf32>
    %c56_195 = arith.constant 56 : index
    %c0_196 = arith.constant 0 : index
    %547 = vector.load %arg12[%c56_195, %c0_196] : memref<64x32xf32, #tpu.memory_space<vmem>>, vector<8x32xf32>
    tpu.vector_store %arg12[%c56_195, %c0_196], %505 {strides = array<i32>} : memref<64x32xf32, #tpu.memory_space<vmem>>, vector<8x32xf32>,
    %c56_197 = arith.constant 56 : index
    %c0_198 = arith.constant 0 : index
    %548 = vector.load %arg13[%c56_197, %c0_198] : memref<64x8xf32, #tpu.memory_space<vmem>>, vector<8x8xf32>
    tpu.vector_store %arg13[%c56_197, %c0_198], %516 {strides = array<i32>} : memref<64x8xf32, #tpu.memory_space<vmem>>, vector<8x8xf32>,
    %c56_199 = arith.constant 56 : index
    %c0_200 = arith.constant 0 : index
    %549 = vector.load %arg14[%c56_199, %c0_200] : memref<64x8xf32, #tpu.memory_space<vmem>>, vector<8x8xf32>
    tpu.vector_store %arg14[%c56_199, %c0_200], %517 {strides = array<i32>} : memref<64x8xf32, #tpu.memory_space<vmem>>, vector<8x8xf32>,
    %c56_201 = arith.constant 56 : index
    %c0_202 = arith.constant 0 : index
    %550 = vector.load %arg15[%c56_201, %c0_202] : memref<64x8xf32, #tpu.memory_space<vmem>>, vector<8x8xf32>
    tpu.vector_store %arg15[%c56_201, %c0_202], %525 {strides = array<i32>} : memref<64x8xf32, #tpu.memory_space<vmem>>, vector<8x8xf32>,
    %c56_203 = arith.constant 56 : index
    %c0_204 = arith.constant 0 : index
    %551 = vector.load %arg16[%c56_203, %c0_204] : memref<64x1xf32, #tpu.memory_space<vmem>>, vector<8x1xf32>
    tpu.vector_store %arg16[%c56_203, %c0_204], %518 {strides = array<i32>} : memref<64x1xf32, #tpu.memory_space<vmem>>, vector<8x1xf32>,
    %cst_205 = arith.constant 0.000000e+00 : f32
    %552 = vector.broadcast %cst_205 : f32 to vector<1x1xf32>
    %553 = vector.shape_cast %534 : vector<8x8xf32> to vector<1x8x8xf32>
    %cst_206 = arith.constant dense<0.000000e+00> : vector<1xf32>
    %554 = vector.multi_reduction <add>, %553, %cst_206 [1, 2] : vector<1x8x8xf32> to vector<1xf32>
    %555 = vector.shape_cast %554 : vector<1xf32> to vector<1x1x1xf32>
    %556 = vector.extract %555[0, 0, 0] : f32 from vector<1x1x1xf32>
    %cst_207 = arith.constant 940.993041 : f32
    %557 = arith.addf %cst_207, %556 : f32
    %cst_208 = arith.constant 5.000000e-01 : f32
    %558 = arith.mulf %cst_208, %557 : f32
    %559 = vector.broadcast %558 : f32 to vector<1x1xf32>
    %560 = arith.addf %552, %559 : vector<1x1xf32>
    %c0_209 = arith.constant 0 : index
    %c0_210 = arith.constant 0 : index
    %561 = vector.load %arg17[%c0_209, %c0_210] : memref<1x1xf32, #tpu.memory_space<vmem>>, vector<1x1xf32>
    tpu.vector_store %arg17[%c0_209, %c0_210], %560 {strides = array<i32>} : memref<1x1xf32, #tpu.memory_space<vmem>>, vector<1x1xf32>,
    %cst_211 = arith.constant 0.000000e+00 : f32
    %562 = vector.broadcast %cst_211 : f32 to vector<1x1xf32>
    %563 = vector.shape_cast %546 : vector<8x1xf32> to vector<1x8x1xf32>
    %cst_212 = arith.constant dense<0.000000e+00> : vector<1xf32>
    %564 = vector.multi_reduction <add>, %563, %cst_212 [1, 2] : vector<1x8x1xf32> to vector<1xf32>
    %565 = vector.shape_cast %564 : vector<1xf32> to vector<1x1x1xf32>
    %566 = vector.extract %565[0, 0, 0] : f32 from vector<1x1x1xf32>
    %567 = vector.broadcast %566 : f32 to vector<1x1xf32>
    %568 = arith.addf %562, %567 : vector<1x1xf32>
    %c0_213 = arith.constant 0 : index
    %c0_214 = arith.constant 0 : index
    %569 = vector.load %arg18[%c0_213, %c0_214] : memref<1x1xf32, #tpu.memory_space<vmem>>, vector<1x1xf32>
    tpu.vector_store %arg18[%c0_213, %c0_214], %568 {strides = array<i32>} : memref<1x1xf32, #tpu.memory_space<vmem>>, vector<1x1xf32>,
    return
  }
}

</mosaic_0001>

<llo_original>
// kernel: rnn_variational_decoder_forward.1
$region0: #{rnn_variational_decoder_forward.1}
  #allocation0 [shape = 'u32[]', space=smem, size = 0x4, offset = 0x4, fixed_abs, tag = 'smem constant byte address 0x4 - core index']
  #allocation1 [shape = 'u32[72,128]{1,0:T(1,128)}', space=vmem, size = 0x9000, scoped, tag = 'internal scratch']
  %s0 = inlined_call_operand.vmem [shape: f32[8,8], index: 0, kind: input, shape index: {}]
  %s1 = inlined_call_operand.vmem [shape: f32[8,8,8], index: 1, kind: input, shape index: {}]
  %s2 = inlined_call_operand.vmem [shape: f32[64,8], index: 2, kind: input, shape index: {}]
  %s3 = inlined_call_operand.vmem [shape: f32[64,1], index: 3, kind: input, shape index: {}]
  %s4 = inlined_call_operand.vmem [shape: bf16[8,64], index: 4, kind: input, shape index: {}]
  %s5 = inlined_call_operand.vmem [shape: f32[1,64], index: 5, kind: input, shape index: {}]
  %s6 = inlined_call_operand.vmem [shape: bf16[8,128], index: 6, kind: input, shape index: {}]
  %s7 = inlined_call_operand.vmem [shape: bf16[32,176], index: 7, kind: input, shape index: {}]
  %s8 = inlined_call_operand.vmem [shape: f32[1,128], index: 8, kind: input, shape index: {}]
  %s9 = inlined_call_operand.vmem [shape: f32[1,48], index: 9, kind: input, shape index: {}]
  %s10 = inlined_call_operand.vmem [shape: bf16[48,17], index: 10, kind: input, shape index: {}]
  %s11 = inlined_call_operand.vmem [shape: f32[1,17], index: 11, kind: input, shape index: {}]
  %s12 = inlined_call_operand.vmem [shape: f32[64,32], index: 12, kind: output, shape index: {0}]
  %s13 = inlined_call_operand.vmem [shape: f32[64,8], index: 13, kind: output, shape index: {1}]
  %s14 = inlined_call_operand.vmem [shape: f32[64,8], index: 14, kind: output, shape index: {2}]
  %s15 = inlined_call_operand.vmem [shape: f32[64,8], index: 15, kind: output, shape index: {3}]
  %s16 = inlined_call_operand.vmem [shape: f32[64,1], index: 16, kind: output, shape index: {4}]
  %s17 = inlined_call_operand.hbm [shape: f32[1,1], index: 17, kind: output, shape index: {5}]
  %s18 = inlined_call_operand.hbm [shape: f32[1,1], index: 18, kind: output, shape index: {6}]
  %19 = xla_tuple %s12, %s13, %s14, %s15, %s16, %s17, %s18
  %s20 = sld [smem:[#allocation0]]
  $region106: #{rnn_variational_decoder_forward.1} parent=0
    _
  %s22 = ssub.s32 1, %s20
  %s23 = scalar_select 0, %s22, %s20
  $region1: #{rnn_variational_decoder_forward.1} parent=0
    #allocation2 [shape = 'u8[512]{0}', space=vmem, size = 0x400, scoped, tag = 'output window, operand 5, single buffered']
    #allocation3 [shape = 's32[1]{0}', space=sflag, size = 0x4, scoped, tag = 'scoped memory for rnn_variational_decoder_forward.1']
    #allocation4 [shape = 'u8[512]{0}', space=vmem, size = 0x400, scoped, tag = 'output window, operand 6, single buffered']
    #allocation5 [shape = 's32[1]{0}', space=sflag, size = 0x4, scoped, tag = 'scoped memory for rnn_variational_decoder_forward.1']
    %24 = vsyncpa [#allocation3], 0
    %25 = vsyncpa [#allocation5], 0
    // Predicated region
    $region2: #{rnn_variational_decoder_forward.1} parent=1 // pred_check
      _
    $region3: #{rnn_variational_decoder_forward.1} parent=1 // pred_check_branch
      %27 = sbr.rel (0) target = $region5
    $region4: #{rnn_variational_decoder_forward.1} parent=1 // pred_region
      _
    $region5: #{rnn_variational_decoder_forward.1} parent=1 // pred_fallthru
      _
    // Predicated region
    $region6: #{rnn_variational_decoder_forward.1} parent=1 // pred_check
      _
    $region7: #{rnn_variational_decoder_forward.1} parent=1 // pred_check_branch
      %29 = sbr.rel (0) target = $region9
    $region8: #{rnn_variational_decoder_forward.1} parent=1 // pred_region
      _
    $region9: #{rnn_variational_decoder_forward.1} parent=1 // pred_fallthru
      _
    // Predicated region
    $region10: #{rnn_variational_decoder_forward.1} parent=1 // pred_check
      _
    $region11: #{rnn_variational_decoder_forward.1} parent=1 // pred_check_branch
      %31 = sbr.rel (0) target = $region13
    $region12: #{rnn_variational_decoder_forward.1} parent=1 // pred_region
      _
    $region13: #{rnn_variational_decoder_forward.1} parent=1 // pred_fallthru
      _
    // Predicated region
    $region14: #{rnn_variational_decoder_forward.1} parent=1 // pred_check
      _
    $region15: #{rnn_variational_decoder_forward.1} parent=1 // pred_check_branch
      %33 = sbr.rel (0) target = $region17
    $region16: #{rnn_variational_decoder_forward.1} parent=1 // pred_region
      _
    $region17: #{rnn_variational_decoder_forward.1} parent=1 // pred_fallthru
      _
    // Predicated region
    $region18: #{rnn_variational_decoder_forward.1} parent=1 // pred_check
      _
    $region19: #{rnn_variational_decoder_forward.1} parent=1 // pred_check_branch
      %35 = sbr.rel (0) target = $region21
    $region20: #{rnn_variational_decoder_forward.1} parent=1 // pred_region
      _
    $region21: #{rnn_variational_decoder_forward.1} parent=1 // pred_fallthru
      _
    // Predicated region
    $region22: #{rnn_variational_decoder_forward.1} parent=1 // pred_check
      _
    $region23: #{rnn_variational_decoder_forward.1} parent=1 // pred_check_branch
      %37 = sbr.rel (0) target = $region25
    $region24: #{rnn_variational_decoder_forward.1} parent=1 // pred_region
      _
    $region25: #{rnn_variational_decoder_forward.1} parent=1 // pred_fallthru
      _
    // Predicated region
    $region26: #{rnn_variational_decoder_forward.1} parent=1 // pred_check
      _
    $region27: #{rnn_variational_decoder_forward.1} parent=1 // pred_check_branch
      %39 = sbr.rel (0) target = $region29
    $region28: #{rnn_variational_decoder_forward.1} parent=1 // pred_region
      _
    $region29: #{rnn_variational_decoder_forward.1} parent=1 // pred_fallthru
      _
    // Predicated region
    $region30: #{rnn_variational_decoder_forward.1} parent=1 // pred_check
      _
    $region31: #{rnn_variational_decoder_forward.1} parent=1 // pred_check_branch
      %41 = sbr.rel (0) target = $region33
    $region32: #{rnn_variational_decoder_forward.1} parent=1 // pred_region
      _
    $region33: #{rnn_variational_decoder_forward.1} parent=1 // pred_fallthru
      _
    // Predicated region
    $region34: #{rnn_variational_decoder_forward.1} parent=1 // pred_check
      _
    $region35: #{rnn_variational_decoder_forward.1} parent=1 // pred_check_branch
      %43 = sbr.rel (0) target = $region37
    $region36: #{rnn_variational_decoder_forward.1} parent=1 // pred_region
      _
    $region37: #{rnn_variational_decoder_forward.1} parent=1 // pred_fallthru
      _
    // Predicated region
    $region38: #{rnn_variational_decoder_forward.1} parent=1 // pred_check
      _
    $region39: #{rnn_variational_decoder_forward.1} parent=1 // pred_check_branch
      %45 = sbr.rel (0) target = $region41
    $region40: #{rnn_variational_decoder_forward.1} parent=1 // pred_region
      _
    $region41: #{rnn_variational_decoder_forward.1} parent=1 // pred_fallthru
      _
    // Predicated region
    $region42: #{rnn_variational_decoder_forward.1} parent=1 // pred_check
      _
    $region43: #{rnn_variational_decoder_forward.1} parent=1 // pred_check_branch
      %47 = sbr.rel (0) target = $region45
    $region44: #{rnn_variational_decoder_forward.1} parent=1 // pred_region
      _
    $region45: #{rnn_variational_decoder_forward.1} parent=1 // pred_fallthru
      _
    // Predicated region
    $region46: #{rnn_variational_decoder_forward.1} parent=1 // pred_check
      _
    $region47: #{rnn_variational_decoder_forward.1} parent=1 // pred_check_branch
      %49 = sbr.rel (0) target = $region49
    $region48: #{rnn_variational_decoder_forward.1} parent=1 // pred_region
      _
    $region49: #{rnn_variational_decoder_forward.1} parent=1 // pred_fallthru
      _
    %v51 = vld [vmem:[%s6] sm:$0xf]
    %v52 = vld [vmem:[%s7] sm:$0xff]
    %v53 = vld [vmem:[%s7 + $0x8] sm:$0xff]
    %v54 = vld [vmem:[%s7 + $0x10] sm:$0xff]
    %v55 = vld [vmem:[%s7 + $0x18] sm:$0xff]
    %v56 = vld [vmem:[%s10] sm:$0xf]
    %v57 = vld [vmem:[%s10 + $0x4] sm:$0xf]
    %v58 = vld [vmem:[%s10 + $0x8] sm:$0xf]
    %v59 = vld [vmem:[%s10 + $0xc] sm:$0xf]
    %v60 = vld [vmem:[%s10 + $0x10] sm:$0xf]
    %v61 = vld [vmem:[%s10 + $0x14] sm:$0xf]
    %v62 = vld [vmem:[%s8] sm:$0x1]
    %v63 = vld [vmem:[%s9] sm:$0x1]
    %v64 = vld [vmem:[%s11] sm:$0x1]
    %v65 = vld [vmem:[%s0] sm:$0xff]
    %v66 = vpack.c.bf16 %v65, %v65
    %v67 = vld [vmem:[%s4] sm:$0xf]
    %v68 = vld [vmem:[%s5] sm:$0x1]
    %v70 = vperm.slane %v68, 0
    %vm72 = vcmask 64512
    %v74 = vsel %vm72, %v66, 0
    %vm76 = vcmask 1043456
    %v78 = vsel %vm76, %v67, 0
    %80 = vmatpush.bf16.msra.mxu0 0
    %81 = vmatpush.bf16.msra.mxu0 0
    %82 = vmatpush.bf16.msra.mxu0 0
    %83 = vmatpush.bf16.msra.mxu0 0
    %84 = vmatpush.bf16.msra.mxu0 0
    %85 = vmatpush.bf16.msra.mxu0 0
    %86 = vmatpush.bf16.msra.mxu0 0
    %87 = vmatpush.bf16.msra.mxu0 %v78
    %88 = vmatmul.bf16.gmra.mxu0 %v74
    %v89 = vpop.f32.mrf.mxu0
    %v90 = vadd.f32 %v70, %v89
    %v91 = vpop.f32.mrf.mxu0
    %92 = vdwg.mxu0
    %v93 = vpack.c.bf16 %v90, %v90
    %v98 = vunpack.c.l.b16 %v52
    %v99 = vunpack.c.l.b16 %v53
    %v100 = vunpack.c.l.b16 %v54
    %v101 = vunpack.c.l.b16 %v55
    %v102 = vpack.c.b16 %v99, %v98
    %v103 = vpack.c.b16 %v101, %v100
    %vm106 = vcmask 261120
    %v108 = vsel %vm106, %v93, 0
    %110 = vmatpush.bf16.msra.mxu0 0
    %111 = vmatpush.bf16.msra.mxu0 0
    %112 = vmatpush.bf16.msra.mxu0 0
    %113 = vmatpush.bf16.msra.mxu0 0
    %114 = vmatpush.bf16.msra.mxu0 0
    %115 = vmatpush.bf16.msra.mxu0 0
    %116 = vmatpush.bf16.msra.mxu0 %v103
    %117 = vmatpush.bf16.msra.mxu0 %v102
    %118 = vmatmul.bf16.gmra.mxu0 %v108
    %v119 = vpop.f32.mrf.mxu0
    %v120 = vadd.f32 0.0, %v119
    %v121 = vpop.f32.mrf.mxu0
    %122 = vdwg.mxu0
    %v124 = vperm.slane %v62, 0
    %v126 = vadd.f32 %v120, %v124
    %v127 = vxor.u32 %v126, 2147483648
    %v128 = vmul.f32 %v127, 1.442695
    %v129 = vpow.pop %v128
    %v130 = vadd.f32 %v129, 1.0
    %v131 = vrcp.pop %v130
    %v132 = vmul.f32 %v130, %v131
    %v133 = vsub.f32 1.0, %v132
    %v134 = vmul.f32 %v131, %v133
    %v135 = vadd.f32 %v131, %v134
    %vm136 = vweird.f32 %v130
    %vm137 = vweird.f32 %v131
    %vm138 = vmor %vm136, %vm137
    %v139 = vsel %vm138, %v131, %v135
    %v140 = vand.u32 2147483647, %v130
    %vm141 = vcmp.eq.f32.partialorder %v140, 8.507059e+37
    %v142 = vand.u32 %v130, 2147483648
    %v143 = vor.u32 1.1754944e-38, %v142
    %v144 = vsel %vm141, %v143, %v139
    %v145 = vmul.f32 1.0, %v144
    %v146 = vtanh.pop %v126
    %v147 = vmul.f32 %v145, %v90
    %149 = vrot.lane.b32.xlu0 %v146, 64
    %v150 = vpop.permute.xlu0 %149
    %v152 = vmul.f32 %v145, %v150
    %154 = vrot.lane.b32.xlu0 %v152, 32
    %v155 = vpop.permute.xlu0 %154
    %v157 = vadd.f32 %v147, %v155
    %v158 = vtanh.pop %v157
    %160 = vrot.lane.b32.xlu0 %v158, 64
    %v161 = vpop.permute.xlu0 %160
    %v163 = vmul.f32 %v145, %v161
    %v164 = vpack.c.bf16 %v163, %v163
    %166 = vrot.lane.b32.xlu0 %v164, 32
    %v167 = vpop.permute.xlu0 %166
    %v168 = vunpack.c.h.b16 %v52
    %v169 = vunpack.c.h.b16 %v53
    %v170 = vunpack.c.h.b16 %v54
    %v171 = vunpack.c.h.b16 %v55
    %v172 = vpack.c.b16 %v169, %v168
    %v173 = vpack.c.b16 %v171, %v170
    %v177 = vsel %vm106, %v167, 0
    %179 = vmatpush.bf16.msra.mxu0 0
    %180 = vmatpush.bf16.msra.mxu0 0
    %181 = vmatpush.bf16.msra.mxu0 0
    %182 = vmatpush.bf16.msra.mxu0 0
    %183 = vmatpush.bf16.msra.mxu0 0
    %184 = vmatpush.bf16.msra.mxu0 0
    %185 = vmatpush.bf16.msra.mxu0 %v103
    %186 = vmatpush.bf16.msra.mxu0 %v102
    %187 = vmatmul.bf16.gmra.mxu0 %v177
    %v188 = vpop.f32.mrf.mxu0
    %v189 = vadd.f32 0.0, %v188
    %v190 = vpop.f32.mrf.mxu0
    %191 = vdwg.mxu0
    %192 = vmatpush.bf16.msra.mxu0 0
    %193 = vmatpush.bf16.msra.mxu0 0
    %194 = vmatpush.bf16.msra.mxu0 0
    %195 = vmatpush.bf16.msra.mxu0 0
    %196 = vmatpush.bf16.msra.mxu0 0
    %197 = vmatpush.bf16.msra.mxu0 0
    %198 = vmatpush.bf16.msra.mxu0 %v173
    %199 = vmatpush.bf16.msra.mxu0 %v172
    %200 = vmatmul.bf16.gmra.mxu0 %v177
    %v201 = vpop.f32.mrf.mxu0
    %v202 = vadd.f32 0.0, %v201
    %v203 = vpop.f32.mrf.mxu0
    %204 = vdwg.mxu0
    %v206 = vperm.slane %v63, 0
    %v208 = vadd.f32 %v202, %v206
    %v209 = vtanh.pop %v208
    %v210 = vpack.c.bf16 %v209, %v209
    %v212 = vperm.slane %v64, 0
    %v220 = vunpack.c.l.b16 %v56
    %v221 = vunpack.c.l.b16 %v57
    %v222 = vunpack.c.l.b16 %v58
    %v223 = vunpack.c.l.b16 %v59
    %v224 = vunpack.c.l.b16 %v60
    %v225 = vunpack.c.l.b16 %v61
    %v226 = vpack.c.b16 %v221, %v220
    %v227 = vpack.c.b16 %v223, %v222
    %v228 = vpack.c.b16 %v225, %v224
    %vm232 = vcmask 392192
    %v234 = vsel %vm232, %v210, 0
    %236 = vmatpush.bf16.msra.mxu0 0
    %237 = vmatpush.bf16.msra.mxu0 0
    %238 = vmatpush.bf16.msra.mxu0 0
    %239 = vmatpush.bf16.msra.mxu0 0
    %240 = vmatpush.bf16.msra.mxu0 0
    %241 = vmatpush.bf16.msra.mxu0 %v228
    %242 = vmatpush.bf16.msra.mxu0 %v227
    %243 = vmatpush.bf16.msra.mxu0 %v226
    %244 = vmatmul.bf16.gmra.mxu0 %v234
    %v245 = vpop.f32.mrf.mxu0
    %v246 = vadd.f32 %v212, %v245
    %v247 = vpop.f32.mrf.mxu0
    %248 = vdwg.mxu0
    %v249 = vmul.f32 %v246, 0.5
    %v250 = vmul.f32 %v249, 1.442695
    %v251 = vpow.pop %v250
    %v252 = vld [vmem:[%s1] sm:$0xff]
    %254 = vrot.lane.b32.xlu0 %v252, 8
    %v255 = vpop.permute.xlu0 %254
    %v257 = vmul.f32 %v251, %v255
    %259 = vrot.lane.b32.xlu0 %v257, 120
    %v260 = vpop.permute.xlu0 %259
    %v262 = vadd.f32 %v246, %v260
    %v263 = vld [vmem:[%s2] sm:$0xff]
    %v264 = vsub.f32 %v263, %v246
    %v265 = vsub.f32 0.0, %v246
    %v266 = vmul.f32 %v265, 1.442695
    %v267 = vpow.pop %v266
    %269 = vrot.lane.b32.xlu0 %v267, 120
    %v270 = vpop.permute.xlu0 %269
    %v272 = vmul.f32 %v264, %v270
    %v273 = vmul.f32 %v272, %v264
    %275 = vrot.lane.b32.xlu0 %v273, 8
    %v276 = vpop.permute.xlu0 %275
    %v278 = vadd.f32 %v246, %v276
    %v279 = vadd.f32 %v278, 0.0
    %v280 = vld [vmem:[%s3] sm:$0xff]
    %v281 = vmax.f32 %v246, 0.0
    %283 = vrot.lane.b32.xlu0 %v280, 16
    %v284 = vpop.permute.xlu0 %283
    %v286 = vmul.f32 %v246, %v284
    %v287 = vsub.f32 %v281, %v286
    %v288 = vand.u32 2147483647, %v246
    %v289 = vsub.f32 0.0, %v288
    %v290 = vmul.f32 %v289, 1.442695
    %v291 = vpow.pop %v290
    %v292 = vadd.f32 %v291, 1.0
    %v293 = vlog2.pop %v292
    %v294 = vmul.f32 %v293, 0.6931472
    %v295 = vmul.f32 -0.5, %v291
    %v296 = vadd.f32 %v295, 1.0
    %v297 = vmul.f32 %v296, %v291
    %v298 = vand.u32 2147483647, %v291
    %vm299 = vcmp.lt.f32.partialorder %v298, 0.0004427343
    %v300 = vsel %vm299, %v297, %v294
    %v301 = vadd.f32 %v287, %v300
    %v302 = vadd.f32 %v301, 0.0
    %304 = vrot.lane.b32.xlu0 %v163, 32
    %v305 = vpop.permute.xlu0 %304
    %307 = vst.msk [vmem:[%s12] sm:$0xff] %vm106, %v305
    %308 = vst.msk [vmem:[%s13] sm:$0xff] %vm72, %v246
    %310 = vrot.lane.b32.xlu0 %v246, 120
    %v311 = vpop.permute.xlu0 %310
    %313 = vst.msk [vmem:[%s14] sm:$0xff] %vm72, %v311
    %314 = vst.msk [vmem:[%s15] sm:$0xff] %vm72, %v262
    %315 = vrot.lane.b32.xlu0 %v246, 112
    %v316 = vpop.permute.xlu0 %315
    %vm318 = vcmask 7168
    %319 = vst.msk [vmem:[%s16] sm:$0xff] %vm318, %v316
    %v320 = vpack.c.bf16 %v262, %v262
    %v322 = vsel %vm72, %v320, 0
    %v325 = vsel %vm76, %v51, 0
    %327 = vmatpush.bf16.msra.mxu0 0
    %328 = vmatpush.bf16.msra.mxu0 0
    %329 = vmatpush.bf16.msra.mxu0 0
    %330 = vmatpush.bf16.msra.mxu0 0
    %331 = vmatpush.bf16.msra.mxu0 0
    %332 = vmatpush.bf16.msra.mxu0 0
    %333 = vmatpush.bf16.msra.mxu0 0
    %334 = vmatpush.bf16.msra.mxu0 %v325
    %335 = vmatmul.bf16.gmra.mxu0 %v322
    %v336 = vpop.f32.mrf.mxu0
    %v337 = vadd.f32 %v189, %v336
    %v338 = vpop.f32.mrf.mxu0
    %339 = vdwg.mxu0
    %v340 = vadd.f32 %v337, %v124
    %v341 = vxor.u32 %v340, 2147483648
    %v342 = vmul.f32 %v341, 1.442695
    %v343 = vpow.pop %v342
    %v344 = vadd.f32 %v343, 1.0
    %v345 = vrcp.pop %v344
    %v346 = vmul.f32 %v344, %v345
    %v347 = vsub.f32 1.0, %v346
    %v348 = vmul.f32 %v345, %v347
    %v349 = vadd.f32 %v345, %v348
    %vm350 = vweird.f32 %v344
    %vm351 = vweird.f32 %v345
    %vm352 = vmor %vm350, %vm351
    %v353 = vsel %vm352, %v345, %v349
    %v354 = vand.u32 2147483647, %v344
    %vm355 = vcmp.eq.f32.partialorder %v354, 8.507059e+37
    %v356 = vand.u32 %v344, 2147483648
    %v357 = vor.u32 1.1754944e-38, %v356
    %v358 = vsel %vm355, %v357, %v353
    %v359 = vmul.f32 1.0, %v358
    %v360 = vtanh.pop %v340
    %v361 = vmul.f32 %v359, %v157
    %363 = vrot.lane.b32.xlu0 %v360, 64
    %v364 = vpop.permute.xlu0 %363
    %v366 = vmul.f32 %v359, %v364
    %368 = vrot.lane.b32.xlu0 %v366, 32
    %v369 = vpop.permute.xlu0 %368
    %v371 = vadd.f32 %v361, %v369
    %v372 = vtanh.pop %v371
    %374 = vrot.lane.b32.xlu0 %v372, 64
    %v375 = vpop.permute.xlu0 %374
    %v377 = vmul.f32 %v359, %v375
    %v378 = vpack.c.bf16 %v377, %v377
    %380 = vrot.lane.b32.xlu0 %v378, 32
    %v381 = vpop.permute.xlu0 %380
    %v383 = vsel %vm106, %v381, 0
    %385 = vmatpush.bf16.msra.mxu0 0
    %386 = vmatpush.bf16.msra.mxu0 0
    %387 = vmatpush.bf16.msra.mxu0 0
    %388 = vmatpush.bf16.msra.mxu0 0
    %389 = vmatpush.bf16.msra.mxu0 0
    %390 = vmatpush.bf16.msra.mxu0 0
    %391 = vmatpush.bf16.msra.mxu0 %v103
    %392 = vmatpush.bf16.msra.mxu0 %v102
    %393 = vmatmul.bf16.gmra.mxu0 %v383
    %v394 = vpop.f32.mrf.mxu0
    %v395 = vadd.f32 0.0, %v394
    %v396 = vpop.f32.mrf.mxu0
    %397 = vdwg.mxu0
    %398 = vmatpush.bf16.msra.mxu0 0
    %399 = vmatpush.bf16.msra.mxu0 0
    %400 = vmatpush.bf16.msra.mxu0 0
    %401 = vmatpush.bf16.msra.mxu0 0
    %402 = vmatpush.bf16.msra.mxu0 0
    %403 = vmatpush.bf16.msra.mxu0 0
    %404 = vmatpush.bf16.msra.mxu0 %v173
    %405 = vmatpush.bf16.msra.mxu0 %v172
    %406 = vmatmul.bf16.gmra.mxu0 %v383
    %v407 = vpop.f32.mrf.mxu0
    %v408 = vadd.f32 0.0, %v407
    %v409 = vpop.f32.mrf.mxu0
    %410 = vdwg.mxu0
    %v411 = vadd.f32 %v408, %v206
    %v412 = vtanh.pop %v411
    %v413 = vpack.c.bf16 %v412, %v412
    %v415 = vsel %vm232, %v413, 0
    %417 = vmatpush.bf16.msra.mxu0 0
    %418 = vmatpush.bf16.msra.mxu0 0
    %419 = vmatpush.bf16.msra.mxu0 0
    %420 = vmatpush.bf16.msra.mxu0 0
    %421 = vmatpush.bf16.msra.mxu0 0
    %422 = vmatpush.bf16.msra.mxu0 %v228
    %423 = vmatpush.bf16.msra.mxu0 %v227
    %424 = vmatpush.bf16.msra.mxu0 %v226
    %425 = vmatmul.bf16.gmra.mxu0 %v415
    %v426 = vpop.f32.mrf.mxu0
    %v427 = vadd.f32 %v212, %v426
    %v428 = vpop.f32.mrf.mxu0
    %429 = vdwg.mxu0
    %v430 = vmul.f32 %v427, 0.5
    %v431 = vmul.f32 %v430, 1.442695
    %v432 = vpow.pop %v431
    %s433 = scalar_lea.vmem %s1, 8
    %v434 = vld [vmem:[%s433] sm:$0xff]
    %436 = vrot.lane.b32.xlu0 %v434, 8
    %v437 = vpop.permute.xlu0 %436
    %v439 = vmul.f32 %v432, %v437
    %441 = vrot.lane.b32.xlu0 %v439, 120
    %v442 = vpop.permute.xlu0 %441
    %v444 = vadd.f32 %v427, %v442
    %v445 = vld [vmem:[%s2 + $0x8] sm:$0xff]
    %v446 = vsub.f32 %v445, %v427
    %v447 = vsub.f32 0.0, %v427
    %v448 = vmul.f32 %v447, 1.442695
    %v449 = vpow.pop %v448
    %451 = vrot.lane.b32.xlu0 %v449, 120
    %v452 = vpop.permute.xlu0 %451
    %v454 = vmul.f32 %v446, %v452
    %v455 = vmul.f32 %v454, %v446
    %457 = vrot.lane.b32.xlu0 %v455, 8
    %v458 = vpop.permute.xlu0 %457
    %v460 = vadd.f32 %v427, %v458
    %v461 = vadd.f32 %v279, %v460
    %v462 = vld [vmem:[%s3 + $0x8] sm:$0xff]
    %v463 = vmax.f32 %v427, 0.0
    %465 = vrot.lane.b32.xlu0 %v462, 16
    %v466 = vpop.permute.xlu0 %465
    %v468 = vmul.f32 %v427, %v466
    %v469 = vsub.f32 %v463, %v468
    %v470 = vand.u32 2147483647, %v427
    %v471 = vsub.f32 0.0, %v470
    %v472 = vmul.f32 %v471, 1.442695
    %v473 = vpow.pop %v472
    %v474 = vadd.f32 %v473, 1.0
    %v475 = vlog2.pop %v474
    %v476 = vmul.f32 %v475, 0.6931472
    %v477 = vmul.f32 -0.5, %v473
    %v478 = vadd.f32 %v477, 1.0
    %v479 = vmul.f32 %v478, %v473
    %v480 = vand.u32 2147483647, %v473
    %vm481 = vcmp.lt.f32.partialorder %v480, 0.0004427343
    %v482 = vsel %vm481, %v479, %v476
    %v483 = vadd.f32 %v469, %v482
    %v484 = vadd.f32 %v302, %v483
    %486 = vrot.lane.b32.xlu0 %v377, 32
    %v487 = vpop.permute.xlu0 %486
    %489 = vst.msk [vmem:[%s12 + $0x8] sm:$0xff] %vm106, %v487
    %490 = vst.msk [vmem:[%s13 + $0x8] sm:$0xff] %vm72, %v427
    %492 = vrot.lane.b32.xlu0 %v427, 120
    %v493 = vpop.permute.xlu0 %492
    %495 = vst.msk [vmem:[%s14 + $0x8] sm:$0xff] %vm72, %v493
    %496 = vst.msk [vmem:[%s15 + $0x8] sm:$0xff] %vm72, %v444
    %497 = vrot.lane.b32.xlu0 %v427, 112
    %v498 = vpop.permute.xlu0 %497
    %500 = vst.msk [vmem:[%s16 + $0x8] sm:$0xff] %vm318, %v498
    %v501 = vpack.c.bf16 %v444, %v444
    %v503 = vsel %vm72, %v501, 0
    %505 = vmatpush.bf16.msra.mxu0 0
    %506 = vmatpush.bf16.msra.mxu0 0
    %507 = vmatpush.bf16.msra.mxu0 0
    %508 = vmatpush.bf16.msra.mxu0 0
    %509 = vmatpush.bf16.msra.mxu0 0
    %510 = vmatpush.bf16.msra.mxu0 0
    %511 = vmatpush.bf16.msra.mxu0 0
    %512 = vmatpush.bf16.msra.mxu0 %v325
    %513 = vmatmul.bf16.gmra.mxu0 %v503
    %v514 = vpop.f32.mrf.mxu0
    %v515 = vadd.f32 %v395, %v514
    %v516 = vpop.f32.mrf.mxu0
    %517 = vdwg.mxu0
    %v518 = vadd.f32 %v515, %v124
    %v519 = vxor.u32 %v518, 2147483648
    %v520 = vmul.f32 %v519, 1.442695
    %v521 = vpow.pop %v520
    %v522 = vadd.f32 %v521, 1.0
    %v523 = vrcp.pop %v522
    %v524 = vmul.f32 %v522, %v523
    %v525 = vsub.f32 1.0, %v524
    %v526 = vmul.f32 %v523, %v525
    %v527 = vadd.f32 %v523, %v526
    %vm528 = vweird.f32 %v522
    %vm529 = vweird.f32 %v523
    %vm530 = vmor %vm528, %vm529
    %v531 = vsel %vm530, %v523, %v527
    %v532 = vand.u32 2147483647, %v522
    %vm533 = vcmp.eq.f32.partialorder %v532, 8.507059e+37
    %v534 = vand.u32 %v522, 2147483648
    %v535 = vor.u32 1.1754944e-38, %v534
    %v536 = vsel %vm533, %v535, %v531
    %v537 = vmul.f32 1.0, %v536
    %v538 = vtanh.pop %v518
    %v539 = vmul.f32 %v537, %v371
    %541 = vrot.lane.b32.xlu0 %v538, 64
    %v542 = vpop.permute.xlu0 %541
    %v544 = vmul.f32 %v537, %v542
    %546 = vrot.lane.b32.xlu0 %v544, 32
    %v547 = vpop.permute.xlu0 %546
    %v549 = vadd.f32 %v539, %v547
    %v550 = vtanh.pop %v549
    %552 = vrot.lane.b32.xlu0 %v550, 64
    %v553 = vpop.permute.xlu0 %552
    %v555 = vmul.f32 %v537, %v553
    %v556 = vpack.c.bf16 %v555, %v555
    %558 = vrot.lane.b32.xlu0 %v556, 32
    %v559 = vpop.permute.xlu0 %558
    %v561 = vsel %vm106, %v559, 0
    %563 = vmatpush.bf16.msra.mxu0 0
    %564 = vmatpush.bf16.msra.mxu0 0
    %565 = vmatpush.bf16.msra.mxu0 0
    %566 = vmatpush.bf16.msra.mxu0 0
    %567 = vmatpush.bf16.msra.mxu0 0
    %568 = vmatpush.bf16.msra.mxu0 0
    %569 = vmatpush.bf16.msra.mxu0 %v103
    %570 = vmatpush.bf16.msra.mxu0 %v102
    %571 = vmatmul.bf16.gmra.mxu0 %v561
    %v572 = vpop.f32.mrf.mxu0
    %v573 = vadd.f32 0.0, %v572
    %v574 = vpop.f32.mrf.mxu0
    %575 = vdwg.mxu0
    %576 = vmatpush.bf16.msra.mxu0 0
    %577 = vmatpush.bf16.msra.mxu0 0
    %578 = vmatpush.bf16.msra.mxu0 0
    %579 = vmatpush.bf16.msra.mxu0 0
    %580 = vmatpush.bf16.msra.mxu0 0
    %581 = vmatpush.bf16.msra.mxu0 0
    %582 = vmatpush.bf16.msra.mxu0 %v173
    %583 = vmatpush.bf16.msra.mxu0 %v172
    %584 = vmatmul.bf16.gmra.mxu0 %v561
    %v585 = vpop.f32.mrf.mxu0
    %v586 = vadd.f32 0.0, %v585
    %v587 = vpop.f32.mrf.mxu0
    %588 = vdwg.mxu0
    %v589 = vadd.f32 %v586, %v206
    %v590 = vtanh.pop %v589
    %v591 = vpack.c.bf16 %v590, %v590
    %v593 = vsel %vm232, %v591, 0
    %595 = vmatpush.bf16.msra.mxu0 0
    %596 = vmatpush.bf16.msra.mxu0 0
    %597 = vmatpush.bf16.msra.mxu0 0
    %598 = vmatpush.bf16.msra.mxu0 0
    %599 = vmatpush.bf16.msra.mxu0 0
    %600 = vmatpush.bf16.msra.mxu0 %v228
    %601 = vmatpush.bf16.msra.mxu0 %v227
    %602 = vmatpush.bf16.msra.mxu0 %v226
    %603 = vmatmul.bf16.gmra.mxu0 %v593
    %v604 = vpop.f32.mrf.mxu0
    %v605 = vadd.f32 %v212, %v604
    %v606 = vpop.f32.mrf.mxu0
    %607 = vdwg.mxu0
    %v608 = vmul.f32 %v605, 0.5
    %v609 = vmul.f32 %v608, 1.442695
    %v610 = vpow.pop %v609
    %s611 = scalar_lea.vmem %s1, 16
    %v612 = vld [vmem:[%s611] sm:$0xff]
    %614 = vrot.lane.b32.xlu0 %v612, 8
    %v615 = vpop.permute.xlu0 %614
    %v617 = vmul.f32 %v610, %v615
    %619 = vrot.lane.b32.xlu0 %v617, 120
    %v620 = vpop.permute.xlu0 %619
    %v622 = vadd.f32 %v605, %v620
    %v623 = vld [vmem:[%s2 + $0x10] sm:$0xff]
    %v624 = vsub.f32 %v623, %v605
    %v625 = vsub.f32 0.0, %v605
    %v626 = vmul.f32 %v625, 1.442695
    %v627 = vpow.pop %v626
    %629 = vrot.lane.b32.xlu0 %v627, 120
    %v630 = vpop.permute.xlu0 %629
    %v632 = vmul.f32 %v624, %v630
    %v633 = vmul.f32 %v632, %v624
    %635 = vrot.lane.b32.xlu0 %v633, 8
    %v636 = vpop.permute.xlu0 %635
    %v638 = vadd.f32 %v605, %v636
    %v639 = vadd.f32 %v461, %v638
    %v640 = vld [vmem:[%s3 + $0x10] sm:$0xff]
    %v641 = vmax.f32 %v605, 0.0
    %643 = vrot.lane.b32.xlu0 %v640, 16
    %v644 = vpop.permute.xlu0 %643
    %v646 = vmul.f32 %v605, %v644
    %v647 = vsub.f32 %v641, %v646
    %v648 = vand.u32 2147483647, %v605
    %v649 = vsub.f32 0.0, %v648
    %v650 = vmul.f32 %v649, 1.442695
    %v651 = vpow.pop %v650
    %v652 = vadd.f32 %v651, 1.0
    %v653 = vlog2.pop %v652
    %v654 = vmul.f32 %v653, 0.6931472
    %v655 = vmul.f32 -0.5, %v651
    %v656 = vadd.f32 %v655, 1.0
    %v657 = vmul.f32 %v656, %v651
    %v658 = vand.u32 2147483647, %v651
    %vm659 = vcmp.lt.f32.partialorder %v658, 0.0004427343
    %v660 = vsel %vm659, %v657, %v654
    %v661 = vadd.f32 %v647, %v660
    %v662 = vadd.f32 %v484, %v661
    %664 = vrot.lane.b32.xlu0 %v555, 32
    %v665 = vpop.permute.xlu0 %664
    %667 = vst.msk [vmem:[%s12 + $0x10] sm:$0xff] %vm106, %v665
    %668 = vst.msk [vmem:[%s13 + $0x10] sm:$0xff] %vm72, %v605
    %670 = vrot.lane.b32.xlu0 %v605, 120
    %v671 = vpop.permute.xlu0 %670
    %673 = vst.msk [vmem:[%s14 + $0x10] sm:$0xff] %vm72, %v671
    %674 = vst.msk [vmem:[%s15 + $0x10] sm:$0xff] %vm72, %v622
    %675 = vrot.lane.b32.xlu0 %v605, 112
    %v676 = vpop.permute.xlu0 %675
    %678 = vst.msk [vmem:[%s16 + $0x10] sm:$0xff] %vm318, %v676
    %v679 = vpack.c.bf16 %v622, %v622
    %v681 = vsel %vm72, %v679, 0
    %683 = vmatpush.bf16.msra.mxu0 0
    %684 = vmatpush.bf16.msra.mxu0 0
    %685 = vmatpush.bf16.msra.mxu0 0
    %686 = vmatpush.bf16.msra.mxu0 0
    %687 = vmatpush.bf16.msra.mxu0 0
    %688 = vmatpush.bf16.msra.mxu0 0
    %689 = vmatpush.bf16.msra.mxu0 0
    %690 = vmatpush.bf16.msra.mxu0 %v325
    %691 = vmatmul.bf16.gmra.mxu0 %v681
    %v692 = vpop.f32.mrf.mxu0
    %v693 = vadd.f32 %v573, %v692
    %v694 = vpop.f32.mrf.mxu0
    %695 = vdwg.mxu0
    %v696 = vadd.f32 %v693, %v124
    %v697 = vxor.u32 %v696, 2147483648
    %v698 = vmul.f32 %v697, 1.442695
    %v699 = vpow.pop %v698
    %v700 = vadd.f32 %v699, 1.0
    %v701 = vrcp.pop %v700
    %v702 = vmul.f32 %v700, %v701
    %v703 = vsub.f32 1.0, %v702
    %v704 = vmul.f32 %v701, %v703
    %v705 = vadd.f32 %v701, %v704
    %vm706 = vweird.f32 %v700
    %vm707 = vweird.f32 %v701
    %vm708 = vmor %vm706, %vm707
    %v709 = vsel %vm708, %v701, %v705
    %v710 = vand.u32 2147483647, %v700
    %vm711 = vcmp.eq.f32.partialorder %v710, 8.507059e+37
    %v712 = vand.u32 %v700, 2147483648
    %v713 = vor.u32 1.1754944e-38, %v712
    %v714 = vsel %vm711, %v713, %v709
    %v715 = vmul.f32 1.0, %v714
    %v716 = vtanh.pop %v696
    %v717 = vmul.f32 %v715, %v549
    %719 = vrot.lane.b32.xlu0 %v716, 64
    %v720 = vpop.permute.xlu0 %719
    %v722 = vmul.f32 %v715, %v720
    %724 = vrot.lane.b32.xlu0 %v722, 32
    %v725 = vpop.permute.xlu0 %724
    %v727 = vadd.f32 %v717, %v725
    %v728 = vtanh.pop %v727
    %730 = vrot.lane.b32.xlu0 %v728, 64
    %v731 = vpop.permute.xlu0 %730
    %v733 = vmul.f32 %v715, %v731
    %v734 = vpack.c.bf16 %v733, %v733
    %736 = vrot.lane.b32.xlu0 %v734, 32
    %v737 = vpop.permute.xlu0 %736
    %v739 = vsel %vm106, %v737, 0
    %741 = vmatpush.bf16.msra.mxu0 0
    %742 = vmatpush.bf16.msra.mxu0 0
    %743 = vmatpush.bf16.msra.mxu0 0
    %744 = vmatpush.bf16.msra.mxu0 0
    %745 = vmatpush.bf16.msra.mxu0 0
    %746 = vmatpush.bf16.msra.mxu0 0
    %747 = vmatpush.bf16.msra.mxu0 %v103
    %748 = vmatpush.bf16.msra.mxu0 %v102
    %749 = vmatmul.bf16.gmra.mxu0 %v739
    %v750 = vpop.f32.mrf.mxu0
    %v751 = vadd.f32 0.0, %v750
    %v752 = vpop.f32.mrf.mxu0
    %753 = vdwg.mxu0
    %754 = vmatpush.bf16.msra.mxu0 0
    %755 = vmatpush.bf16.msra.mxu0 0
    %756 = vmatpush.bf16.msra.mxu0 0
    %757 = vmatpush.bf16.msra.mxu0 0
    %758 = vmatpush.bf16.msra.mxu0 0
    %759 = vmatpush.bf16.msra.mxu0 0
    %760 = vmatpush.bf16.msra.mxu0 %v173
    %761 = vmatpush.bf16.msra.mxu0 %v172
    %762 = vmatmul.bf16.gmra.mxu0 %v739
    %v763 = vpop.f32.mrf.mxu0
    %v764 = vadd.f32 0.0, %v763
    %v765 = vpop.f32.mrf.mxu0
    %766 = vdwg.mxu0
    %v767 = vadd.f32 %v764, %v206
    %v768 = vtanh.pop %v767
    %v769 = vpack.c.bf16 %v768, %v768
    %v771 = vsel %vm232, %v769, 0
    %773 = vmatpush.bf16.msra.mxu0 0
    %774 = vmatpush.bf16.msra.mxu0 0
    %775 = vmatpush.bf16.msra.mxu0 0
    %776 = vmatpush.bf16.msra.mxu0 0
    %777 = vmatpush.bf16.msra.mxu0 0
    %778 = vmatpush.bf16.msra.mxu0 %v228
    %779 = vmatpush.bf16.msra.mxu0 %v227
    %780 = vmatpush.bf16.msra.mxu0 %v226
    %781 = vmatmul.bf16.gmra.mxu0 %v771
    %v782 = vpop.f32.mrf.mxu0
    %v783 = vadd.f32 %v212, %v782
    %v784 = vpop.f32.mrf.mxu0
    %785 = vdwg.mxu0
    %v786 = vmul.f32 %v783, 0.5
    %v787 = vmul.f32 %v786, 1.442695
    %v788 = vpow.pop %v787
    %s789 = scalar_lea.vmem %s1, 24
    %v790 = vld [vmem:[%s789] sm:$0xff]
    %792 = vrot.lane.b32.xlu0 %v790, 8
    %v793 = vpop.permute.xlu0 %792
    %v795 = vmul.f32 %v788, %v793
    %797 = vrot.lane.b32.xlu0 %v795, 120
    %v798 = vpop.permute.xlu0 %797
    %v800 = vadd.f32 %v783, %v798
    %v801 = vld [vmem:[%s2 + $0x18] sm:$0xff]
    %v802 = vsub.f32 %v801, %v783
    %v803 = vsub.f32 0.0, %v783
    %v804 = vmul.f32 %v803, 1.442695
    %v805 = vpow.pop %v804
    %807 = vrot.lane.b32.xlu0 %v805, 120
    %v808 = vpop.permute.xlu0 %807
    %v810 = vmul.f32 %v802, %v808
    %v811 = vmul.f32 %v810, %v802
    %813 = vrot.lane.b32.xlu0 %v811, 8
    %v814 = vpop.permute.xlu0 %813
    %v816 = vadd.f32 %v783, %v814
    %v817 = vadd.f32 %v639, %v816
    %v818 = vld [vmem:[%s3 + $0x18] sm:$0xff]
    %v819 = vmax.f32 %v783, 0.0
    %821 = vrot.lane.b32.xlu0 %v818, 16
    %v822 = vpop.permute.xlu0 %821
    %v824 = vmul.f32 %v783, %v822
    %v825 = vsub.f32 %v819, %v824
    %v826 = vand.u32 2147483647, %v783
    %v827 = vsub.f32 0.0, %v826
    %v828 = vmul.f32 %v827, 1.442695
    %v829 = vpow.pop %v828
    %v830 = vadd.f32 %v829, 1.0
    %v831 = vlog2.pop %v830
    %v832 = vmul.f32 %v831, 0.6931472
    %v833 = vmul.f32 -0.5, %v829
    %v834 = vadd.f32 %v833, 1.0
    %v835 = vmul.f32 %v834, %v829
    %v836 = vand.u32 2147483647, %v829
    %vm837 = vcmp.lt.f32.partialorder %v836, 0.0004427343
    %v838 = vsel %vm837, %v835, %v832
    %v839 = vadd.f32 %v825, %v838
    %v840 = vadd.f32 %v662, %v839
    %842 = vrot.lane.b32.xlu0 %v733, 32
    %v843 = vpop.permute.xlu0 %842
    %845 = vst.msk [vmem:[%s12 + $0x18] sm:$0xff] %vm106, %v843
    %846 = vst.msk [vmem:[%s13 + $0x18] sm:$0xff] %vm72, %v783
    %848 = vrot.lane.b32.xlu0 %v783, 120
    %v849 = vpop.permute.xlu0 %848
    %851 = vst.msk [vmem:[%s14 + $0x18] sm:$0xff] %vm72, %v849
    %852 = vst.msk [vmem:[%s15 + $0x18] sm:$0xff] %vm72, %v800
    %853 = vrot.lane.b32.xlu0 %v783, 112
    %v854 = vpop.permute.xlu0 %853
    %856 = vst.msk [vmem:[%s16 + $0x18] sm:$0xff] %vm318, %v854
    %v857 = vpack.c.bf16 %v800, %v800
    %v859 = vsel %vm72, %v857, 0
    %861 = vmatpush.bf16.msra.mxu0 0
    %862 = vmatpush.bf16.msra.mxu0 0
    %863 = vmatpush.bf16.msra.mxu0 0
    %864 = vmatpush.bf16.msra.mxu0 0
    %865 = vmatpush.bf16.msra.mxu0 0
    %866 = vmatpush.bf16.msra.mxu0 0
    %867 = vmatpush.bf16.msra.mxu0 0
    %868 = vmatpush.bf16.msra.mxu0 %v325
    %869 = vmatmul.bf16.gmra.mxu0 %v859
    %v870 = vpop.f32.mrf.mxu0
    %v871 = vadd.f32 %v751, %v870
    %v872 = vpop.f32.mrf.mxu0
    %873 = vdwg.mxu0
    %v874 = vadd.f32 %v871, %v124
    %v875 = vxor.u32 %v874, 2147483648
    %v876 = vmul.f32 %v875, 1.442695
    %v877 = vpow.pop %v876
    %v878 = vadd.f32 %v877, 1.0
    %v879 = vrcp.pop %v878
    %v880 = vmul.f32 %v878, %v879
    %v881 = vsub.f32 1.0, %v880
    %v882 = vmul.f32 %v879, %v881
    %v883 = vadd.f32 %v879, %v882
    %vm884 = vweird.f32 %v878
    %vm885 = vweird.f32 %v879
    %vm886 = vmor %vm884, %vm885
    %v887 = vsel %vm886, %v879, %v883
    %v888 = vand.u32 2147483647, %v878
    %vm889 = vcmp.eq.f32.partialorder %v888, 8.507059e+37
    %v890 = vand.u32 %v878, 2147483648
    %v891 = vor.u32 1.1754944e-38, %v890
    %v892 = vsel %vm889, %v891, %v887
    %v893 = vmul.f32 1.0, %v892
    %v894 = vtanh.pop %v874
    %v895 = vmul.f32 %v893, %v727
    %897 = vrot.lane.b32.xlu0 %v894, 64
    %v898 = vpop.permute.xlu0 %897
    %v900 = vmul.f32 %v893, %v898
    %902 = vrot.lane.b32.xlu0 %v900, 32
    %v903 = vpop.permute.xlu0 %902
    %v905 = vadd.f32 %v895, %v903
    %v906 = vtanh.pop %v905
    %908 = vrot.lane.b32.xlu0 %v906, 64
    %v909 = vpop.permute.xlu0 %908
    %v911 = vmul.f32 %v893, %v909
    %v912 = vpack.c.bf16 %v911, %v911
    %914 = vrot.lane.b32.xlu0 %v912, 32
    %v915 = vpop.permute.xlu0 %914
    %v917 = vsel %vm106, %v915, 0
    %919 = vmatpush.bf16.msra.mxu0 0
    %920 = vmatpush.bf16.msra.mxu0 0
    %921 = vmatpush.bf16.msra.mxu0 0
    %922 = vmatpush.bf16.msra.mxu0 0
    %923 = vmatpush.bf16.msra.mxu0 0
    %924 = vmatpush.bf16.msra.mxu0 0
    %925 = vmatpush.bf16.msra.mxu0 %v103
    %926 = vmatpush.bf16.msra.mxu0 %v102
    %927 = vmatmul.bf16.gmra.mxu0 %v917
    %v928 = vpop.f32.mrf.mxu0
    %v929 = vadd.f32 0.0, %v928
    %v930 = vpop.f32.mrf.mxu0
    %931 = vdwg.mxu0
    %932 = vmatpush.bf16.msra.mxu0 0
    %933 = vmatpush.bf16.msra.mxu0 0
    %934 = vmatpush.bf16.msra.mxu0 0
    %935 = vmatpush.bf16.msra.mxu0 0
    %936 = vmatpush.bf16.msra.mxu0 0
    %937 = vmatpush.bf16.msra.mxu0 0
    %938 = vmatpush.bf16.msra.mxu0 %v173
    %939 = vmatpush.bf16.msra.mxu0 %v172
    %940 = vmatmul.bf16.gmra.mxu0 %v917
    %v941 = vpop.f32.mrf.mxu0
    %v942 = vadd.f32 0.0, %v941
    %v943 = vpop.f32.mrf.mxu0
    %944 = vdwg.mxu0
    %v945 = vadd.f32 %v942, %v206
    %v946 = vtanh.pop %v945
    %v947 = vpack.c.bf16 %v946, %v946
    %v949 = vsel %vm232, %v947, 0
    %951 = vmatpush.bf16.msra.mxu0 0
    %952 = vmatpush.bf16.msra.mxu0 0
    %953 = vmatpush.bf16.msra.mxu0 0
    %954 = vmatpush.bf16.msra.mxu0 0
    %955 = vmatpush.bf16.msra.mxu0 0
    %956 = vmatpush.bf16.msra.mxu0 %v228
    %957 = vmatpush.bf16.msra.mxu0 %v227
    %958 = vmatpush.bf16.msra.mxu0 %v226
    %959 = vmatmul.bf16.gmra.mxu0 %v949
    %v960 = vpop.f32.mrf.mxu0
    %v961 = vadd.f32 %v212, %v960
    %v962 = vpop.f32.mrf.mxu0
    %963 = vdwg.mxu0
    %v964 = vmul.f32 %v961, 0.5
    %v965 = vmul.f32 %v964, 1.442695
    %v966 = vpow.pop %v965
    %s967 = scalar_lea.vmem %s1, 32
    %v968 = vld [vmem:[%s967] sm:$0xff]
    %970 = vrot.lane.b32.xlu0 %v968, 8
    %v971 = vpop.permute.xlu0 %970
    %v973 = vmul.f32 %v966, %v971
    %975 = vrot.lane.b32.xlu0 %v973, 120
    %v976 = vpop.permute.xlu0 %975
    %v978 = vadd.f32 %v961, %v976
    %v979 = vld [vmem:[%s2 + $0x20] sm:$0xff]
    %v980 = vsub.f32 %v979, %v961
    %v981 = vsub.f32 0.0, %v961
    %v982 = vmul.f32 %v981, 1.442695
    %v983 = vpow.pop %v982
    %985 = vrot.lane.b32.xlu0 %v983, 120
    %v986 = vpop.permute.xlu0 %985
    %v988 = vmul.f32 %v980, %v986
    %v989 = vmul.f32 %v988, %v980
    %991 = vrot.lane.b32.xlu0 %v989, 8
    %v992 = vpop.permute.xlu0 %991
    %v994 = vadd.f32 %v961, %v992
    %v995 = vadd.f32 %v817, %v994
    %v996 = vld [vmem:[%s3 + $0x20] sm:$0xff]
    %v997 = vmax.f32 %v961, 0.0
    %999 = vrot.lane.b32.xlu0 %v996, 16
    %v1000 = vpop.permute.xlu0 %999
    %v1002 = vmul.f32 %v961, %v1000
    %v1003 = vsub.f32 %v997, %v1002
    %v1004 = vand.u32 2147483647, %v961
    %v1005 = vsub.f32 0.0, %v1004
    %v1006 = vmul.f32 %v1005, 1.442695
    %v1007 = vpow.pop %v1006
    %v1008 = vadd.f32 %v1007, 1.0
    %v1009 = vlog2.pop %v1008
    %v1010 = vmul.f32 %v1009, 0.6931472
    %v1011 = vmul.f32 -0.5, %v1007
    %v1012 = vadd.f32 %v1011, 1.0
    %v1013 = vmul.f32 %v1012, %v1007
    %v1014 = vand.u32 2147483647, %v1007
    %vm1015 = vcmp.lt.f32.partialorder %v1014, 0.0004427343
    %v1016 = vsel %vm1015, %v1013, %v1010
    %v1017 = vadd.f32 %v1003, %v1016
    %v1018 = vadd.f32 %v840, %v1017
    %1020 = vrot.lane.b32.xlu0 %v911, 32
    %v1021 = vpop.permute.xlu0 %1020
    %1023 = vst.msk [vmem:[%s12 + $0x20] sm:$0xff] %vm106, %v1021
    %1024 = vst.msk [vmem:[%s13 + $0x20] sm:$0xff] %vm72, %v961
    %1026 = vrot.lane.b32.xlu0 %v961, 120
    %v1027 = vpop.permute.xlu0 %1026
    %1029 = vst.msk [vmem:[%s14 + $0x20] sm:$0xff] %vm72, %v1027
    %1030 = vst.msk [vmem:[%s15 + $0x20] sm:$0xff] %vm72, %v978
    %1031 = vrot.lane.b32.xlu0 %v961, 112
    %v1032 = vpop.permute.xlu0 %1031
    %1034 = vst.msk [vmem:[%s16 + $0x20] sm:$0xff] %vm318, %v1032
    %v1035 = vpack.c.bf16 %v978, %v978
    %v1037 = vsel %vm72, %v1035, 0
    %1039 = vmatpush.bf16.msra.mxu0 0
    %1040 = vmatpush.bf16.msra.mxu0 0
    %1041 = vmatpush.bf16.msra.mxu0 0
    %1042 = vmatpush.bf16.msra.mxu0 0
    %1043 = vmatpush.bf16.msra.mxu0 0
    %1044 = vmatpush.bf16.msra.mxu0 0
    %1045 = vmatpush.bf16.msra.mxu0 0
    %1046 = vmatpush.bf16.msra.mxu0 %v325
    %1047 = vmatmul.bf16.gmra.mxu0 %v1037
    %v1048 = vpop.f32.mrf.mxu0
    %v1049 = vadd.f32 %v929, %v1048
    %v1050 = vpop.f32.mrf.mxu0
    %1051 = vdwg.mxu0
    %v1052 = vadd.f32 %v1049, %v124
    %v1053 = vxor.u32 %v1052, 2147483648
    %v1054 = vmul.f32 %v1053, 1.442695
    %v1055 = vpow.pop %v1054
    %v1056 = vadd.f32 %v1055, 1.0
    %v1057 = vrcp.pop %v1056
    %v1058 = vmul.f32 %v1056, %v1057
    %v1059 = vsub.f32 1.0, %v1058
    %v1060 = vmul.f32 %v1057, %v1059
    %v1061 = vadd.f32 %v1057, %v1060
    %vm1062 = vweird.f32 %v1056
    %vm1063 = vweird.f32 %v1057
    %vm1064 = vmor %vm1062, %vm1063
    %v1065 = vsel %vm1064, %v1057, %v1061
    %v1066 = vand.u32 2147483647, %v1056
    %vm1067 = vcmp.eq.f32.partialorder %v1066, 8.507059e+37
    %v1068 = vand.u32 %v1056, 2147483648
    %v1069 = vor.u32 1.1754944e-38, %v1068
    %v1070 = vsel %vm1067, %v1069, %v1065
    %v1071 = vmul.f32 1.0, %v1070
    %v1072 = vtanh.pop %v1052
    %v1073 = vmul.f32 %v1071, %v905
    %1075 = vrot.lane.b32.xlu0 %v1072, 64
    %v1076 = vpop.permute.xlu0 %1075
    %v1078 = vmul.f32 %v1071, %v1076
    %1080 = vrot.lane.b32.xlu0 %v1078, 32
    %v1081 = vpop.permute.xlu0 %1080
    %v1083 = vadd.f32 %v1073, %v1081
    %v1084 = vtanh.pop %v1083
    %1086 = vrot.lane.b32.xlu0 %v1084, 64
    %v1087 = vpop.permute.xlu0 %1086
    %v1089 = vmul.f32 %v1071, %v1087
    %v1090 = vpack.c.bf16 %v1089, %v1089
    %1092 = vrot.lane.b32.xlu0 %v1090, 32
    %v1093 = vpop.permute.xlu0 %1092
    %v1095 = vsel %vm106, %v1093, 0
    %1097 = vmatpush.bf16.msra.mxu0 0
    %1098 = vmatpush.bf16.msra.mxu0 0
    %1099 = vmatpush.bf16.msra.mxu0 0
    %1100 = vmatpush.bf16.msra.mxu0 0
    %1101 = vmatpush.bf16.msra.mxu0 0
    %1102 = vmatpush.bf16.msra.mxu0 0
    %1103 = vmatpush.bf16.msra.mxu0 %v103
    %1104 = vmatpush.bf16.msra.mxu0 %v102
    %1105 = vmatmul.bf16.gmra.mxu0 %v1095
    %v1106 = vpop.f32.mrf.mxu0
    %v1107 = vadd.f32 0.0, %v1106
    %v1108 = vpop.f32.mrf.mxu0
    %1109 = vdwg.mxu0
    %1110 = vmatpush.bf16.msra.mxu0 0
    %1111 = vmatpush.bf16.msra.mxu0 0
    %1112 = vmatpush.bf16.msra.mxu0 0
    %1113 = vmatpush.bf16.msra.mxu0 0
    %1114 = vmatpush.bf16.msra.mxu0 0
    %1115 = vmatpush.bf16.msra.mxu0 0
    %1116 = vmatpush.bf16.msra.mxu0 %v173
    %1117 = vmatpush.bf16.msra.mxu0 %v172
    %1118 = vmatmul.bf16.gmra.mxu0 %v1095
    %v1119 = vpop.f32.mrf.mxu0
    %v1120 = vadd.f32 0.0, %v1119
    %v1121 = vpop.f32.mrf.mxu0
    %1122 = vdwg.mxu0
    %v1123 = vadd.f32 %v1120, %v206
    %v1124 = vtanh.pop %v1123
    %v1125 = vpack.c.bf16 %v1124, %v1124
    %v1127 = vsel %vm232, %v1125, 0
    %1129 = vmatpush.bf16.msra.mxu0 0
    %1130 = vmatpush.bf16.msra.mxu0 0
    %1131 = vmatpush.bf16.msra.mxu0 0
    %1132 = vmatpush.bf16.msra.mxu0 0
    %1133 = vmatpush.bf16.msra.mxu0 0
    %1134 = vmatpush.bf16.msra.mxu0 %v228
    %1135 = vmatpush.bf16.msra.mxu0 %v227
    %1136 = vmatpush.bf16.msra.mxu0 %v226
    %1137 = vmatmul.bf16.gmra.mxu0 %v1127
    %v1138 = vpop.f32.mrf.mxu0
    %v1139 = vadd.f32 %v212, %v1138
    %v1140 = vpop.f32.mrf.mxu0
    %1141 = vdwg.mxu0
    %v1142 = vmul.f32 %v1139, 0.5
    %v1143 = vmul.f32 %v1142, 1.442695
    %v1144 = vpow.pop %v1143
    %s1145 = scalar_lea.vmem %s1, 40
    %v1146 = vld [vmem:[%s1145] sm:$0xff]
    %1148 = vrot.lane.b32.xlu0 %v1146, 8
    %v1149 = vpop.permute.xlu0 %1148
    %v1151 = vmul.f32 %v1144, %v1149
    %1153 = vrot.lane.b32.xlu0 %v1151, 120
    %v1154 = vpop.permute.xlu0 %1153
    %v1156 = vadd.f32 %v1139, %v1154
    %v1157 = vld [vmem:[%s2 + $0x28] sm:$0xff]
    %v1158 = vsub.f32 %v1157, %v1139
    %v1159 = vsub.f32 0.0, %v1139
    %v1160 = vmul.f32 %v1159, 1.442695
    %v1161 = vpow.pop %v1160
    %1163 = vrot.lane.b32.xlu0 %v1161, 120
    %v1164 = vpop.permute.xlu0 %1163
    %v1166 = vmul.f32 %v1158, %v1164
    %v1167 = vmul.f32 %v1166, %v1158
    %1169 = vrot.lane.b32.xlu0 %v1167, 8
    %v1170 = vpop.permute.xlu0 %1169
    %v1172 = vadd.f32 %v1139, %v1170
    %v1173 = vadd.f32 %v995, %v1172
    %v1174 = vld [vmem:[%s3 + $0x28] sm:$0xff]
    %v1175 = vmax.f32 %v1139, 0.0
    %1177 = vrot.lane.b32.xlu0 %v1174, 16
    %v1178 = vpop.permute.xlu0 %1177
    %v1180 = vmul.f32 %v1139, %v1178
    %v1181 = vsub.f32 %v1175, %v1180
    %v1182 = vand.u32 2147483647, %v1139
    %v1183 = vsub.f32 0.0, %v1182
    %v1184 = vmul.f32 %v1183, 1.442695
    %v1185 = vpow.pop %v1184
    %v1186 = vadd.f32 %v1185, 1.0
    %v1187 = vlog2.pop %v1186
    %v1188 = vmul.f32 %v1187, 0.6931472
    %v1189 = vmul.f32 -0.5, %v1185
    %v1190 = vadd.f32 %v1189, 1.0
    %v1191 = vmul.f32 %v1190, %v1185
    %v1192 = vand.u32 2147483647, %v1185
    %vm1193 = vcmp.lt.f32.partialorder %v1192, 0.0004427343
    %v1194 = vsel %vm1193, %v1191, %v1188
    %v1195 = vadd.f32 %v1181, %v1194
    %v1196 = vadd.f32 %v1018, %v1195
    %1198 = vrot.lane.b32.xlu0 %v1089, 32
    %v1199 = vpop.permute.xlu0 %1198
    %1201 = vst.msk [vmem:[%s12 + $0x28] sm:$0xff] %vm106, %v1199
    %1202 = vst.msk [vmem:[%s13 + $0x28] sm:$0xff] %vm72, %v1139
    %1204 = vrot.lane.b32.xlu0 %v1139, 120
    %v1205 = vpop.permute.xlu0 %1204
    %1207 = vst.msk [vmem:[%s14 + $0x28] sm:$0xff] %vm72, %v1205
    %1208 = vst.msk [vmem:[%s15 + $0x28] sm:$0xff] %vm72, %v1156
    %1209 = vrot.lane.b32.xlu0 %v1139, 112
    %v1210 = vpop.permute.xlu0 %1209
    %1212 = vst.msk [vmem:[%s16 + $0x28] sm:$0xff] %vm318, %v1210
    %v1213 = vpack.c.bf16 %v1156, %v1156
    %v1215 = vsel %vm72, %v1213, 0
    %1217 = vmatpush.bf16.msra.mxu0 0
    %1218 = vmatpush.bf16.msra.mxu0 0
    %1219 = vmatpush.bf16.msra.mxu0 0
    %1220 = vmatpush.bf16.msra.mxu0 0
    %1221 = vmatpush.bf16.msra.mxu0 0
    %1222 = vmatpush.bf16.msra.mxu0 0
    %1223 = vmatpush.bf16.msra.mxu0 0
    %1224 = vmatpush.bf16.msra.mxu0 %v325
    %1225 = vmatmul.bf16.gmra.mxu0 %v1215
    %v1226 = vpop.f32.mrf.mxu0
    %v1227 = vadd.f32 %v1107, %v1226
    %v1228 = vpop.f32.mrf.mxu0
    %1229 = vdwg.mxu0
    %v1230 = vadd.f32 %v1227, %v124
    %v1231 = vxor.u32 %v1230, 2147483648
    %v1232 = vmul.f32 %v1231, 1.442695
    %v1233 = vpow.pop %v1232
    %v1234 = vadd.f32 %v1233, 1.0
    %v1235 = vrcp.pop %v1234
    %v1236 = vmul.f32 %v1234, %v1235
    %v1237 = vsub.f32 1.0, %v1236
    %v1238 = vmul.f32 %v1235, %v1237
    %v1239 = vadd.f32 %v1235, %v1238
    %vm1240 = vweird.f32 %v1234
    %vm1241 = vweird.f32 %v1235
    %vm1242 = vmor %vm1240, %vm1241
    %v1243 = vsel %vm1242, %v1235, %v1239
    %v1244 = vand.u32 2147483647, %v1234
    %vm1245 = vcmp.eq.f32.partialorder %v1244, 8.507059e+37
    %v1246 = vand.u32 %v1234, 2147483648
    %v1247 = vor.u32 1.1754944e-38, %v1246
    %v1248 = vsel %vm1245, %v1247, %v1243
    %v1249 = vmul.f32 1.0, %v1248
    %v1250 = vtanh.pop %v1230
    %v1251 = vmul.f32 %v1249, %v1083
    %1253 = vrot.lane.b32.xlu0 %v1250, 64
    %v1254 = vpop.permute.xlu0 %1253
    %v1256 = vmul.f32 %v1249, %v1254
    %1258 = vrot.lane.b32.xlu0 %v1256, 32
    %v1259 = vpop.permute.xlu0 %1258
    %v1261 = vadd.f32 %v1251, %v1259
    %v1262 = vtanh.pop %v1261
    %1264 = vrot.lane.b32.xlu0 %v1262, 64
    %v1265 = vpop.permute.xlu0 %1264
    %v1267 = vmul.f32 %v1249, %v1265
    %v1268 = vpack.c.bf16 %v1267, %v1267
    %1270 = vrot.lane.b32.xlu0 %v1268, 32
    %v1271 = vpop.permute.xlu0 %1270
    %v1273 = vsel %vm106, %v1271, 0
    %1275 = vmatpush.bf16.msra.mxu0 0
    %1276 = vmatpush.bf16.msra.mxu0 0
    %1277 = vmatpush.bf16.msra.mxu0 0
    %1278 = vmatpush.bf16.msra.mxu0 0
    %1279 = vmatpush.bf16.msra.mxu0 0
    %1280 = vmatpush.bf16.msra.mxu0 0
    %1281 = vmatpush.bf16.msra.mxu0 %v103
    %1282 = vmatpush.bf16.msra.mxu0 %v102
    %1283 = vmatmul.bf16.gmra.mxu0 %v1273
    %v1284 = vpop.f32.mrf.mxu0
    %v1285 = vadd.f32 0.0, %v1284
    %v1286 = vpop.f32.mrf.mxu0
    %1287 = vdwg.mxu0
    %1288 = vmatpush.bf16.msra.mxu0 0
    %1289 = vmatpush.bf16.msra.mxu0 0
    %1290 = vmatpush.bf16.msra.mxu0 0
    %1291 = vmatpush.bf16.msra.mxu0 0
    %1292 = vmatpush.bf16.msra.mxu0 0
    %1293 = vmatpush.bf16.msra.mxu0 0
    %1294 = vmatpush.bf16.msra.mxu0 %v173
    %1295 = vmatpush.bf16.msra.mxu0 %v172
    %1296 = vmatmul.bf16.gmra.mxu0 %v1273
    %v1297 = vpop.f32.mrf.mxu0
    %v1298 = vadd.f32 0.0, %v1297
    %v1299 = vpop.f32.mrf.mxu0
    %1300 = vdwg.mxu0
    %v1301 = vadd.f32 %v1298, %v206
    %v1302 = vtanh.pop %v1301
    %v1303 = vpack.c.bf16 %v1302, %v1302
    %v1305 = vsel %vm232, %v1303, 0
    %1307 = vmatpush.bf16.msra.mxu0 0
    %1308 = vmatpush.bf16.msra.mxu0 0
    %1309 = vmatpush.bf16.msra.mxu0 0
    %1310 = vmatpush.bf16.msra.mxu0 0
    %1311 = vmatpush.bf16.msra.mxu0 0
    %1312 = vmatpush.bf16.msra.mxu0 %v228
    %1313 = vmatpush.bf16.msra.mxu0 %v227
    %1314 = vmatpush.bf16.msra.mxu0 %v226
    %1315 = vmatmul.bf16.gmra.mxu0 %v1305
    %v1316 = vpop.f32.mrf.mxu0
    %v1317 = vadd.f32 %v212, %v1316
    %v1318 = vpop.f32.mrf.mxu0
    %1319 = vdwg.mxu0
    %v1320 = vmul.f32 %v1317, 0.5
    %v1321 = vmul.f32 %v1320, 1.442695
    %v1322 = vpow.pop %v1321
    %s1323 = scalar_lea.vmem %s1, 48
    %v1324 = vld [vmem:[%s1323] sm:$0xff]
    %1326 = vrot.lane.b32.xlu0 %v1324, 8
    %v1327 = vpop.permute.xlu0 %1326
    %v1329 = vmul.f32 %v1322, %v1327
    %1331 = vrot.lane.b32.xlu0 %v1329, 120
    %v1332 = vpop.permute.xlu0 %1331
    %v1334 = vadd.f32 %v1317, %v1332
    %v1335 = vld [vmem:[%s2 + $0x30] sm:$0xff]
    %v1336 = vsub.f32 %v1335, %v1317
    %v1337 = vsub.f32 0.0, %v1317
    %v1338 = vmul.f32 %v1337, 1.442695
    %v1339 = vpow.pop %v1338
    %1341 = vrot.lane.b32.xlu0 %v1339, 120
    %v1342 = vpop.permute.xlu0 %1341
    %v1344 = vmul.f32 %v1336, %v1342
    %v1345 = vmul.f32 %v1344, %v1336
    %1347 = vrot.lane.b32.xlu0 %v1345, 8
    %v1348 = vpop.permute.xlu0 %1347
    %v1350 = vadd.f32 %v1317, %v1348
    %v1351 = vadd.f32 %v1173, %v1350
    %v1352 = vld [vmem:[%s3 + $0x30] sm:$0xff]
    %v1353 = vmax.f32 %v1317, 0.0
    %1355 = vrot.lane.b32.xlu0 %v1352, 16
    %v1356 = vpop.permute.xlu0 %1355
    %v1358 = vmul.f32 %v1317, %v1356
    %v1359 = vsub.f32 %v1353, %v1358
    %v1360 = vand.u32 2147483647, %v1317
    %v1361 = vsub.f32 0.0, %v1360
    %v1362 = vmul.f32 %v1361, 1.442695
    %v1363 = vpow.pop %v1362
    %v1364 = vadd.f32 %v1363, 1.0
    %v1365 = vlog2.pop %v1364
    %v1366 = vmul.f32 %v1365, 0.6931472
    %v1367 = vmul.f32 -0.5, %v1363
    %v1368 = vadd.f32 %v1367, 1.0
    %v1369 = vmul.f32 %v1368, %v1363
    %v1370 = vand.u32 2147483647, %v1363
    %vm1371 = vcmp.lt.f32.partialorder %v1370, 0.0004427343
    %v1372 = vsel %vm1371, %v1369, %v1366
    %v1373 = vadd.f32 %v1359, %v1372
    %v1374 = vadd.f32 %v1196, %v1373
    %1376 = vrot.lane.b32.xlu0 %v1267, 32
    %v1377 = vpop.permute.xlu0 %1376
    %1379 = vst.msk [vmem:[%s12 + $0x30] sm:$0xff] %vm106, %v1377
    %1380 = vst.msk [vmem:[%s13 + $0x30] sm:$0xff] %vm72, %v1317
    %1382 = vrot.lane.b32.xlu0 %v1317, 120
    %v1383 = vpop.permute.xlu0 %1382
    %1385 = vst.msk [vmem:[%s14 + $0x30] sm:$0xff] %vm72, %v1383
    %1386 = vst.msk [vmem:[%s15 + $0x30] sm:$0xff] %vm72, %v1334
    %1387 = vrot.lane.b32.xlu0 %v1317, 112
    %v1388 = vpop.permute.xlu0 %1387
    %1390 = vst.msk [vmem:[%s16 + $0x30] sm:$0xff] %vm318, %v1388
    %v1391 = vpack.c.bf16 %v1334, %v1334
    %v1393 = vsel %vm72, %v1391, 0
    %1395 = vmatpush.bf16.msra.mxu0 0
    %1396 = vmatpush.bf16.msra.mxu0 0
    %1397 = vmatpush.bf16.msra.mxu0 0
    %1398 = vmatpush.bf16.msra.mxu0 0
    %1399 = vmatpush.bf16.msra.mxu0 0
    %1400 = vmatpush.bf16.msra.mxu0 0
    %1401 = vmatpush.bf16.msra.mxu0 0
    %1402 = vmatpush.bf16.msra.mxu0 %v325
    %1403 = vmatmul.bf16.gmra.mxu0 %v1393
    %v1404 = vpop.f32.mrf.mxu0
    %v1405 = vadd.f32 %v1285, %v1404
    %v1406 = vpop.f32.mrf.mxu0
    %1407 = vdwg.mxu0
    %v1408 = vadd.f32 %v1405, %v124
    %v1409 = vxor.u32 %v1408, 2147483648
    %v1410 = vmul.f32 %v1409, 1.442695
    %v1411 = vpow.pop %v1410
    %v1412 = vadd.f32 %v1411, 1.0
    %v1413 = vrcp.pop %v1412
    %v1414 = vmul.f32 %v1412, %v1413
    %v1415 = vsub.f32 1.0, %v1414
    %v1416 = vmul.f32 %v1413, %v1415
    %v1417 = vadd.f32 %v1413, %v1416
    %vm1418 = vweird.f32 %v1412
    %vm1419 = vweird.f32 %v1413
    %vm1420 = vmor %vm1418, %vm1419
    %v1421 = vsel %vm1420, %v1413, %v1417
    %v1422 = vand.u32 2147483647, %v1412
    %vm1423 = vcmp.eq.f32.partialorder %v1422, 8.507059e+37
    %v1424 = vand.u32 %v1412, 2147483648
    %v1425 = vor.u32 1.1754944e-38, %v1424
    %v1426 = vsel %vm1423, %v1425, %v1421
    %v1427 = vmul.f32 1.0, %v1426
    %v1428 = vtanh.pop %v1408
    %v1429 = vmul.f32 %v1427, %v1261
    %1431 = vrot.lane.b32.xlu0 %v1428, 64
    %v1432 = vpop.permute.xlu0 %1431
    %v1434 = vmul.f32 %v1427, %v1432
    %1436 = vrot.lane.b32.xlu0 %v1434, 32
    %v1437 = vpop.permute.xlu0 %1436
    %v1439 = vadd.f32 %v1429, %v1437
    %v1440 = vtanh.pop %v1439
    %1442 = vrot.lane.b32.xlu0 %v1440, 64
    %v1443 = vpop.permute.xlu0 %1442
    %v1445 = vmul.f32 %v1427, %v1443
    %v1446 = vpack.c.bf16 %v1445, %v1445
    %1448 = vrot.lane.b32.xlu0 %v1446, 32
    %v1449 = vpop.permute.xlu0 %1448
    %v1451 = vsel %vm106, %v1449, 0
    %1453 = vmatpush.bf16.msra.mxu0 0
    %1454 = vmatpush.bf16.msra.mxu0 0
    %1455 = vmatpush.bf16.msra.mxu0 0
    %1456 = vmatpush.bf16.msra.mxu0 0
    %1457 = vmatpush.bf16.msra.mxu0 0
    %1458 = vmatpush.bf16.msra.mxu0 0
    %1459 = vmatpush.bf16.msra.mxu0 %v173
    %1460 = vmatpush.bf16.msra.mxu0 %v172
    %1461 = vmatmul.bf16.gmra.mxu0 %v1451
    %v1462 = vpop.f32.mrf.mxu0
    %v1463 = vadd.f32 0.0, %v1462
    %v1464 = vpop.f32.mrf.mxu0
    %1465 = vdwg.mxu0
    %v1466 = vadd.f32 %v1463, %v206
    %v1467 = vtanh.pop %v1466
    %v1468 = vpack.c.bf16 %v1467, %v1467
    %v1470 = vsel %vm232, %v1468, 0
    %1472 = vmatpush.bf16.msra.mxu0 0
    %1473 = vmatpush.bf16.msra.mxu0 0
    %1474 = vmatpush.bf16.msra.mxu0 0
    %1475 = vmatpush.bf16.msra.mxu0 0
    %1476 = vmatpush.bf16.msra.mxu0 0
    %1477 = vmatpush.bf16.msra.mxu0 %v228
    %1478 = vmatpush.bf16.msra.mxu0 %v227
    %1479 = vmatpush.bf16.msra.mxu0 %v226
    %1480 = vmatmul.bf16.gmra.mxu0 %v1470
    %v1481 = vpop.f32.mrf.mxu0
    %v1482 = vadd.f32 %v212, %v1481
    %v1483 = vpop.f32.mrf.mxu0
    %1484 = vdwg.mxu0
    %v1485 = vmul.f32 %v1482, 0.5
    %v1486 = vmul.f32 %v1485, 1.442695
    %v1487 = vpow.pop %v1486
    %s1488 = scalar_lea.vmem %s1, 56
    %v1489 = vld [vmem:[%s1488] sm:$0xff]
    %1491 = vrot.lane.b32.xlu0 %v1489, 8
    %v1492 = vpop.permute.xlu0 %1491
    %v1494 = vmul.f32 %v1487, %v1492
    %1496 = vrot.lane.b32.xlu0 %v1494, 120
    %v1497 = vpop.permute.xlu0 %1496
    %v1499 = vadd.f32 %v1482, %v1497
    %v1500 = vld [vmem:[%s2 + $0x38] sm:$0xff]
    %v1501 = vsub.f32 %v1500, %v1482
    %v1502 = vsub.f32 0.0, %v1482
    %v1503 = vmul.f32 %v1502, 1.442695
    %v1504 = vpow.pop %v1503
    %1506 = vrot.lane.b32.xlu0 %v1504, 120
    %v1507 = vpop.permute.xlu0 %1506
    %v1509 = vmul.f32 %v1501, %v1507
    %v1510 = vmul.f32 %v1509, %v1501
    %1512 = vrot.lane.b32.xlu0 %v1510, 8
    %v1513 = vpop.permute.xlu0 %1512
    %v1515 = vadd.f32 %v1482, %v1513
    %v1516 = vadd.f32 %v1351, %v1515
    %v1517 = vld [vmem:[%s3 + $0x38] sm:$0xff]
    %v1518 = vmax.f32 %v1482, 0.0
    %1520 = vrot.lane.b32.xlu0 %v1517, 16
    %v1521 = vpop.permute.xlu0 %1520
    %v1523 = vmul.f32 %v1482, %v1521
    %v1524 = vsub.f32 %v1518, %v1523
    %v1525 = vand.u32 2147483647, %v1482
    %v1526 = vsub.f32 0.0, %v1525
    %v1527 = vmul.f32 %v1526, 1.442695
    %v1528 = vpow.pop %v1527
    %v1529 = vadd.f32 %v1528, 1.0
    %v1530 = vlog2.pop %v1529
    %v1531 = vmul.f32 %v1530, 0.6931472
    %v1532 = vmul.f32 -0.5, %v1528
    %v1533 = vadd.f32 %v1532, 1.0
    %v1534 = vmul.f32 %v1533, %v1528
    %v1535 = vand.u32 2147483647, %v1528
    %vm1536 = vcmp.lt.f32.partialorder %v1535, 0.0004427343
    %v1537 = vsel %vm1536, %v1534, %v1531
    %v1538 = vadd.f32 %v1524, %v1537
    %v1539 = vadd.f32 %v1374, %v1538
    %1541 = vrot.lane.b32.xlu0 %v1445, 32
    %v1542 = vpop.permute.xlu0 %1541
    %1544 = vst.msk [vmem:[%s12 + $0x38] sm:$0xff] %vm106, %v1542
    %1545 = vst.msk [vmem:[%s13 + $0x38] sm:$0xff] %vm72, %v1482
    %1547 = vrot.lane.b32.xlu0 %v1482, 120
    %v1548 = vpop.permute.xlu0 %1547
    %1550 = vst.msk [vmem:[%s14 + $0x38] sm:$0xff] %vm72, %v1548
    %1551 = vst.msk [vmem:[%s15 + $0x38] sm:$0xff] %vm72, %v1499
    %1552 = vrot.lane.b32.xlu0 %v1482, 112
    %v1553 = vpop.permute.xlu0 %1552
    %1555 = vst.msk [vmem:[%s16 + $0x38] sm:$0xff] %vm318, %v1553
    %1557 = vrot.lane.b32.xlu0 %v1516, 120
    %v1558 = vpop.permute.xlu0 %1557
    %v1560 = vsel %vm72, %v1558, 0.0
    %1561 = vadd.xlane.f32.xlu0 %v1560
    %v1562 = vpop.xlane.xlu0 %1561
    %v1563 = vrot.slane %v1562, 4
    %v1564 = vadd.f32 %v1562, %v1563
    %v1565 = vrot.slane %v1564, 2
    %v1566 = vadd.f32 %v1564, %v1565
    %v1567 = vrot.slane %v1566, 1
    %v1568 = vadd.f32 %v1566, %v1567
    %s1569 = vtos %v1568
    %s1570 = sadd.f32 %s1569, 940.99304
    %s1571 = smul.f32 %s1570, 0.5
    %v1572 = vstv %s1571
    %v1573 = vadd.f32 %v1572, 0.0
    %vm1574 = vcmask 0
    %1575 = vst.msk [vmem:[#allocation2] sm:$0x1] %vm1574, %v1573
    %1577 = vrot.lane.b32.xlu0 %v1539, 112
    %v1578 = vpop.permute.xlu0 %1577
    %v1580 = vsel %vm318, %v1578, 0.0
    %1581 = vadd.xlane.f32.xlu0 %v1580
    %v1582 = vpop.xlane.xlu0 %1581
    %v1583 = vrot.slane %v1582, 4
    %v1584 = vadd.f32 %v1582, %v1583
    %v1585 = vrot.slane %v1584, 2
    %v1586 = vadd.f32 %v1584, %v1585
    %v1587 = vrot.slane %v1586, 1
    %v1588 = vadd.f32 %v1586, %v1587
    %s1589 = vtos %v1588
    %v1590 = vstv %s1589
    %v1591 = vadd.f32 %v1590, 0.0
    %1592 = vst.msk [vmem:[#allocation4] sm:$0x1] %vm1574, %v1591
    // Predicated region
    $region50: #{rnn_variational_decoder_forward.1} parent=1 // pred_check
      _
    $region51: #{rnn_variational_decoder_forward.1} parent=1 // pred_check_branch
      %1594 = sbr.rel (0) target = $region53
    $region52: #{rnn_variational_decoder_forward.1} parent=1 // pred_region
      _
    $region53: #{rnn_variational_decoder_forward.1} parent=1 // pred_fallthru
      _
    // Predicated region
    $region54: #{rnn_variational_decoder_forward.1} parent=1 // pred_check
      _
    $region55: #{rnn_variational_decoder_forward.1} parent=1 // pred_check_branch
      %1596 = sbr.rel (0) target = $region57
    $region56: #{rnn_variational_decoder_forward.1} parent=1 // pred_region
      _
    $region57: #{rnn_variational_decoder_forward.1} parent=1 // pred_fallthru
      _
    // Predicated region
    $region58: #{rnn_variational_decoder_forward.1} parent=1 // pred_check
      _
    $region59: #{rnn_variational_decoder_forward.1} parent=1 // pred_check_branch
      %1598 = sbr.rel (0) target = $region61
    $region60: #{rnn_variational_decoder_forward.1} parent=1 // pred_region
      _
    $region61: #{rnn_variational_decoder_forward.1} parent=1 // pred_fallthru
      _
    // Predicated region
    $region62: #{rnn_variational_decoder_forward.1} parent=1 // pred_check
      _
    $region63: #{rnn_variational_decoder_forward.1} parent=1 // pred_check_branch
      %1600 = sbr.rel (0) target = $region65
    $region64: #{rnn_variational_decoder_forward.1} parent=1 // pred_region
      _
    $region65: #{rnn_variational_decoder_forward.1} parent=1 // pred_fallthru
      _
    // Predicated region
    $region66: #{rnn_variational_decoder_forward.1} parent=1 // pred_check
      _
    $region67: #{rnn_variational_decoder_forward.1} parent=1 // pred_check_branch
      %1602 = sbr.rel (0) target = $region69
    $region68: #{rnn_variational_decoder_forward.1} parent=1 // pred_region
      _
    $region69: #{rnn_variational_decoder_forward.1} parent=1 // pred_fallthru
      _
    // Predicated region
    $region70: #{rnn_variational_decoder_forward.1} parent=1 // pred_check
      _
    $region71: #{rnn_variational_decoder_forward.1} parent=1 // pred_check_branch
      %1604 = sbr.rel (0) target = $region73
    $region72: #{rnn_variational_decoder_forward.1} parent=1 // pred_region
      %1606 = vsyncadd [#allocation3], 0
      %s1608 = sshll.u32 [#allocation2], 4
      %s1609 = int_to_ptr.vmem [resolvable:$true] %s1608
      %s1610 = sshll.u32 %s17, 4
      %s1611 = int_to_ptr.hbm [resolvable:$true] %s1610
      %1613 = dma.vmem_to_hbm [thread:$0]  %s1609, 16, %s1611, [#allocation3]
    $region73: #{rnn_variational_decoder_forward.1} parent=1 // pred_fallthru
      _
    // Predicated region
    $region74: #{rnn_variational_decoder_forward.1} parent=1 // pred_check
      _
    $region75: #{rnn_variational_decoder_forward.1} parent=1 // pred_check_branch
      %1615 = sbr.rel (0) target = $region77
    $region76: #{rnn_variational_decoder_forward.1} parent=1 // pred_region
      %1617 = vsyncadd [#allocation5], 0
      %s1619 = sshll.u32 [#allocation4], 4
      %s1620 = int_to_ptr.vmem [resolvable:$true] %s1619
      %s1621 = sshll.u32 %s18, 4
      %s1622 = int_to_ptr.hbm [resolvable:$true] %s1621
      %1624 = dma.vmem_to_hbm [thread:$0]  %s1620, 16, %s1622, [#allocation5]
    $region77: #{rnn_variational_decoder_forward.1} parent=1 // pred_fallthru
      _
    // Predicated region
    $region78: #{rnn_variational_decoder_forward.1} parent=1 // pred_check
      _
    $region79: #{rnn_variational_decoder_forward.1} parent=1 // pred_check_branch
      %1626 = sbr.rel (0) target = $region81
    $region80: #{rnn_variational_decoder_forward.1} parent=1 // pred_region
      _
    $region81: #{rnn_variational_decoder_forward.1} parent=1 // pred_fallthru
      _
    // Predicated region
    $region82: #{rnn_variational_decoder_forward.1} parent=1 // pred_check
      _
    $region83: #{rnn_variational_decoder_forward.1} parent=1 // pred_check_branch
      %1628 = sbr.rel (0) target = $region85
    $region84: #{rnn_variational_decoder_forward.1} parent=1 // pred_region
      _
    $region85: #{rnn_variational_decoder_forward.1} parent=1 // pred_fallthru
      _
    // Predicated region
    $region86: #{rnn_variational_decoder_forward.1} parent=1 // pred_check
      _
    $region87: #{rnn_variational_decoder_forward.1} parent=1 // pred_check_branch
      %1630 = sbr.rel (0) target = $region89
    $region88: #{rnn_variational_decoder_forward.1} parent=1 // pred_region
      _
    $region89: #{rnn_variational_decoder_forward.1} parent=1 // pred_fallthru
      _
    // Predicated region
    $region90: #{rnn_variational_decoder_forward.1} parent=1 // pred_check
      _
    $region91: #{rnn_variational_decoder_forward.1} parent=1 // pred_check_branch
      %1632 = sbr.rel (0) target = $region93
    $region92: #{rnn_variational_decoder_forward.1} parent=1 // pred_region
      _
    $region93: #{rnn_variational_decoder_forward.1} parent=1 // pred_fallthru
      _
    // Predicated region
    $region94: #{rnn_variational_decoder_forward.1} parent=1 // pred_check
      _
    $region95: #{rnn_variational_decoder_forward.1} parent=1 // pred_check_branch
      %1634 = sbr.rel (0) target = $region97
    $region96: #{rnn_variational_decoder_forward.1} parent=1 // pred_region
      _
    $region97: #{rnn_variational_decoder_forward.1} parent=1 // pred_fallthru
      _
    // Predicated region
    $region98: #{rnn_variational_decoder_forward.1} parent=1 // pred_check
      _
    $region99: #{rnn_variational_decoder_forward.1} parent=1 // pred_check_branch
      %1636 = sbr.rel (0) target = $region101
    $region100: #{rnn_variational_decoder_forward.1} parent=1 // pred_region
      %1638 = dma.done [#allocation3], 16
    $region101: #{rnn_variational_decoder_forward.1} parent=1 // pred_fallthru
      _
    // Predicated region
    $region102: #{rnn_variational_decoder_forward.1} parent=1 // pred_check
      _
    $region103: #{rnn_variational_decoder_forward.1} parent=1 // pred_check_branch
      %1640 = sbr.rel (0) target = $region105
    $region104: #{rnn_variational_decoder_forward.1} parent=1 // pred_region
      %1642 = dma.done [#allocation5], 16
    $region105: #{rnn_variational_decoder_forward.1} parent=1 // pred_fallthru
      _
    %1643 = vsyncpa [#allocation3], 1
    %1644 = vsyncpa [#allocation5], 1

</llo_original>
